<compile_context>
chip_gen: v7x
topology: tpu7x:2x2x1
jax: 0.10.0
libtpu: 0.0.40
codegen_flags: <defaults>
</compile_context>

<pallas_src>
import jax
import jax.numpy as jnp
from jax.experimental import pallas as pl
from jax.experimental.pallas import tpu as pltpu

_HP = jax.lax.Precision.HIGHEST  # bit-faithful f32 matmuls (K is tiny, cost ~0)


def _pi_mlp_kernel(x_ref, w1_ref, b1_ref, w2_ref, b2_ref, w3_ref, b3_ref, out_ref):
    x = x_ref[...]                                                    # (8, TB)

    # Layer 1: Linear(8, 64) + ReLU     -> (64, TB)
    h1 = jnp.dot(w1_ref[...], x,
                 preferred_element_type=jnp.float32, precision=_HP) + b1_ref[...]
    h1 = jnp.maximum(h1, 0.0)

    # Layer 2: Linear(64, 16) + ReLU    -> (16, TB)
    h2 = jnp.dot(w2_ref[...], h1,
                 preferred_element_type=jnp.float32, precision=_HP) + b2_ref[...]
    h2 = jnp.maximum(h2, 0.0)

    # Layer 3: Linear(16, 2)            -> (2, TB)
    out = jnp.dot(w3_ref[...], h2,
                  preferred_element_type=jnp.float32, precision=_HP) + b3_ref[...]
    out_ref[...] = out.astype(out_ref.dtype)


def pi_forward(x, params, *, tb=128):
    """Forward pass of Pi. x: (B, 8) float32 -> (B, 2) float32."""
    assert tb % 128 == 0, "batch tile must be a multiple of the 128-lane width"
    w1, b1, w2, b2, w3, b3 = params          # w: (out, in), b: (out, 1)
    B = x.shape[0]
    x = x.astype(jnp.float32)

    # Lane-dense layout: batch on the last (lane) axis; pad B to a tile multiple.
    b_pad = pl.cdiv(B, tb) * tb
    x_t = jnp.pad(x.T, ((0, 0), (0, b_pad - B)))          # (8, B_pad)

    resident = lambda i: (0, 0)                            # weights/biases: DMA once
    grid = (b_pad // tb,)

    out_t = pl.pallas_call(
        _pi_mlp_kernel,
        out_shape=jax.ShapeDtypeStruct((2, b_pad), jnp.float32),
        grid=grid,
        in_specs=[
            pl.BlockSpec((8, tb), lambda i: (0, i)),       # x tile (streams)
            pl.BlockSpec((64, 8), resident),               # W1
            pl.BlockSpec((64, 1), resident),               # b1
            pl.BlockSpec((16, 64), resident),              # W2
            pl.BlockSpec((16, 1), resident),               # b2
            pl.BlockSpec((2, 16), resident),               # W3
            pl.BlockSpec((2, 1), resident),                # b3
        ],
        out_specs=pl.BlockSpec((2, tb), lambda i: (0, i)),
        compiler_params=pltpu.CompilerParams(
            dimension_semantics=("parallel",),
        ),
    )(x_t, w1, b1, w2, b2, w3, b3)

    return out_t[:, :B].T                                  # (B, 2)


def init_pi_params(key):
    """Deterministic init mimicking nn.Linear's default U(-1/sqrt(fan_in), ...).

    Weights are stored in PyTorch (out_features, in_features) orientation;
    biases as (out_features, 1) so they broadcast over the lane (batch) axis.
    """
    dims = [(8, 64), (64, 16), (16, 2)]
    params = []
    for (fan_in, fan_out) in dims:
        key, kw, kb = jax.random.split(key, 3)
        bound = 1.0 / jnp.sqrt(float(fan_in))
        w = jax.random.uniform(kw, (fan_out, fan_in), jnp.float32, -bound, bound)
        b = jax.random.uniform(kb, (fan_out, 1), jnp.float32, -bound, bound)
        params.extend([w, b])
    return tuple(params)


def pi_forward_reference(x, params):
    """Pure-JAX reference (same math, same precision) for correctness check."""
    w1, b1, w2, b2, w3, b3 = params
    h1 = jnp.maximum(jnp.dot(x, w1.T, precision=_HP) + b1.T, 0.0)
    h2 = jnp.maximum(jnp.dot(h1, w2.T, precision=_HP) + b2.T, 0.0)
    return jnp.dot(h2, w3.T, precision=_HP) + b3.T


if __name__ == "__main__":
    key = jax.random.PRNGKey(0)
    key, kx = jax.random.split(key)

    batch = 200                      # exercises 2 grid tiles + ragged-tail padding
    x = jax.random.normal(kx, (batch, 8), dtype=jnp.float32)

    params = init_pi_params(key)

    out = pi_forward(x, params, tb=128)
    out = jax.block_until_ready(out)

    ref = pi_forward_reference(x, params)
    assert out.shape == (batch, 2)
    assert jnp.allclose(out, ref, atol=1e-5, rtol=1e-5)

    print("KERNEL_OK")
</pallas_src>

<mosaic_0001>
module attributes {stable_mosaic.version = 11 : i64} {
  func.func @_pi_mlp_kernel(%arg0: i32, %arg1: memref<8x128xf32, #tpu.memory_space<vmem>>, %arg2: memref<64x8xf32, #tpu.memory_space<vmem>>, %arg3: memref<64x1xf32, #tpu.memory_space<vmem>>, %arg4: memref<16x64xf32, #tpu.memory_space<vmem>>, %arg5: memref<16x1xf32, #tpu.memory_space<vmem>>, %arg6: memref<2x16xf32, #tpu.memory_space<vmem>>, %arg7: memref<2x1xf32, #tpu.memory_space<vmem>>, %arg8: memref<2x128xf32, #tpu.memory_space<vmem>>) attributes {dimension_semantics = [#tpu.dimension_semantics<parallel>], iteration_bounds = array<i64: 2>, scalar_prefetch = 0 : i64, scratch_operands = 0 : i64, tpu.core_type = #tpu.core_type<tc>, window_params = [{transform_indices = @transform_0, window_bounds = array<i64: 8, 128>}, {pipeline_mode = #tpu.pipeline_mode<synchronous>, transform_indices = @transform_1, window_bounds = array<i64: 64, 8>}, {pipeline_mode = #tpu.pipeline_mode<synchronous>, transform_indices = @transform_2, window_bounds = array<i64: 64, 1>}, {pipeline_mode = #tpu.pipeline_mode<synchronous>, transform_indices = @transform_3, window_bounds = array<i64: 16, 64>}, {pipeline_mode = #tpu.pipeline_mode<synchronous>, transform_indices = @transform_4, window_bounds = array<i64: 16, 1>}, {pipeline_mode = #tpu.pipeline_mode<synchronous>, transform_indices = @transform_5, window_bounds = array<i64: 2, 16>}, {pipeline_mode = #tpu.pipeline_mode<synchronous>, transform_indices = @transform_6, window_bounds = array<i64: 2, 1>}, {transform_indices = @transform_7, window_bounds = array<i64: 2, 128>}]} {
    %c0 = arith.constant 0 : index
    %c0_0 = arith.constant 0 : index
    %0 = vector.load %arg1[%c0, %c0_0] : memref<8x128xf32, #tpu.memory_space<vmem>>, vector<8x128xf32>
    %c0_1 = arith.constant 0 : index
    %c0_2 = arith.constant 0 : index
    %1 = vector.load %arg2[%c0_1, %c0_2] : memref<64x8xf32, #tpu.memory_space<vmem>>, vector<64x8xf32>
    %cst = arith.constant dense<0.000000e+00> : vector<64x128xf32>
    %2 = tpu.matmul %1, %0, %cst {dimension_numbers = #tpu.dot_dimension_numbers<[1], [0], [0], [1], [0, 0, 1, 1], [], []>, precision = #tpu.contract_precision<fp32>} : vector<64x8xf32>, vector<8x128xf32>, vector<64x128xf32> -> vector<64x128xf32>
    %c0_3 = arith.constant 0 : index
    %c0_4 = arith.constant 0 : index
    %3 = vector.load %arg3[%c0_3, %c0_4] : memref<64x1xf32, #tpu.memory_space<vmem>>, vector<64x1xf32>
    %4 = vector.broadcast %3 : vector<64x1xf32> to vector<64x128xf32>
    %5 = arith.addf %2, %4 : vector<64x128xf32>
    %cst_5 = arith.constant 0.000000e+00 : f32
    %6 = vector.broadcast %cst_5 : f32 to vector<64x128xf32>
    %7 = arith.maximumf %5, %6 : vector<64x128xf32>
    %c0_6 = arith.constant 0 : index
    %c0_7 = arith.constant 0 : index
    %8 = vector.load %arg4[%c0_6, %c0_7] : memref<16x64xf32, #tpu.memory_space<vmem>>, vector<16x64xf32>
    %cst_8 = arith.constant dense<0.000000e+00> : vector<16x128xf32>
    %9 = tpu.matmul %8, %7, %cst_8 {dimension_numbers = #tpu.dot_dimension_numbers<[1], [0], [0], [1], [0, 0, 1, 1], [], []>, precision = #tpu.contract_precision<fp32>} : vector<16x64xf32>, vector<64x128xf32>, vector<16x128xf32> -> vector<16x128xf32>
    %c0_9 = arith.constant 0 : index
    %c0_10 = arith.constant 0 : index
    %10 = vector.load %arg5[%c0_9, %c0_10] : memref<16x1xf32, #tpu.memory_space<vmem>>, vector<16x1xf32>
    %11 = vector.broadcast %10 : vector<16x1xf32> to vector<16x128xf32>
    %12 = arith.addf %9, %11 : vector<16x128xf32>
    %cst_11 = arith.constant 0.000000e+00 : f32
    %13 = vector.broadcast %cst_11 : f32 to vector<16x128xf32>
    %14 = arith.maximumf %12, %13 : vector<16x128xf32>
    %c0_12 = arith.constant 0 : index
    %c0_13 = arith.constant 0 : index
    %15 = vector.load %arg6[%c0_12, %c0_13] : memref<2x16xf32, #tpu.memory_space<vmem>>, vector<2x16xf32>
    %cst_14 = arith.constant dense<0.000000e+00> : vector<2x128xf32>
    %16 = tpu.matmul %15, %14, %cst_14 {dimension_numbers = #tpu.dot_dimension_numbers<[1], [0], [0], [1], [0, 0, 1, 1], [], []>, precision = #tpu.contract_precision<fp32>} : vector<2x16xf32>, vector<16x128xf32>, vector<2x128xf32> -> vector<2x128xf32>
    %c0_15 = arith.constant 0 : index
    %c0_16 = arith.constant 0 : index
    %17 = vector.load %arg7[%c0_15, %c0_16] : memref<2x1xf32, #tpu.memory_space<vmem>>, vector<2x1xf32>
    %18 = vector.broadcast %17 : vector<2x1xf32> to vector<2x128xf32>
    %19 = arith.addf %16, %18 : vector<2x128xf32>
    %c0_17 = arith.constant 0 : index
    %c0_18 = arith.constant 0 : index
    %20 = vector.load %arg8[%c0_17, %c0_18] : memref<2x128xf32, #tpu.memory_space<vmem>>, vector<2x128xf32>
    tpu.vector_store %arg8[%c0_17, %c0_18], %19 {strides = array<i32>} : memref<2x128xf32, #tpu.memory_space<vmem>>, vector<2x128xf32>,
    return
  }
  func.func @transform_0(%arg0: i32) -> (i32, i32) {
    %c0_i32 = arith.constant 0 : i32
    %c0_i32_0 = arith.constant 0 : i32
    return %c0_i32, %arg0 : i32, i32
  }
  func.func @transform_1(%arg0: i32) -> (i32, i32) {
    %c0_i32 = arith.constant 0 : i32
    %c0_i32_0 = arith.constant 0 : i32
    %c0_i32_1 = arith.constant 0 : i32
    return %c0_i32, %c0_i32_0 : i32, i32
  }
  func.func @transform_2(%arg0: i32) -> (i32, i32) {
    %c0_i32 = arith.constant 0 : i32
    %c0_i32_0 = arith.constant 0 : i32
    %c0_i32_1 = arith.constant 0 : i32
    return %c0_i32, %c0_i32_0 : i32, i32
  }
  func.func @transform_3(%arg0: i32) -> (i32, i32) {
    %c0_i32 = arith.constant 0 : i32
    %c0_i32_0 = arith.constant 0 : i32
    %c0_i32_1 = arith.constant 0 : i32
    return %c0_i32, %c0_i32_0 : i32, i32
  }
  func.func @transform_4(%arg0: i32) -> (i32, i32) {
    %c0_i32 = arith.constant 0 : i32
    %c0_i32_0 = arith.constant 0 : i32
    %c0_i32_1 = arith.constant 0 : i32
    return %c0_i32, %c0_i32_0 : i32, i32
  }
  func.func @transform_5(%arg0: i32) -> (i32, i32) {
    %c0_i32 = arith.constant 0 : i32
    %c0_i32_0 = arith.constant 0 : i32
    %c0_i32_1 = arith.constant 0 : i32
    return %c0_i32, %c0_i32_0 : i32, i32
  }
  func.func @transform_6(%arg0: i32) -> (i32, i32) {
    %c0_i32 = arith.constant 0 : i32
    %c0_i32_0 = arith.constant 0 : i32
    %c0_i32_1 = arith.constant 0 : i32
    return %c0_i32, %c0_i32_0 : i32, i32
  }
  func.func @transform_7(%arg0: i32) -> (i32, i32) {
    %c0_i32 = arith.constant 0 : i32
    %c0_i32_0 = arith.constant 0 : i32
    return %c0_i32, %arg0 : i32, i32
  }
}

</mosaic_0001>

<llo_original>
// kernel: tpu_custom_call.1
$region0: #{tpu_custom_call.1}
  #allocation0 [shape = 'u32[]', space=smem, size = 0x4, offset = 0x4, fixed_abs, tag = 'smem constant byte address 0x4 - core index']
  #allocation1 [shape = 'u32[144,128]{1,0:T(1,128)}', space=vmem, size = 0x12000, scoped, tag = 'internal scratch']
  %s0 = inlined_call_operand.vmem [shape: f32[8,256], index: 0, kind: input, shape index: {}]
  %s1 = inlined_call_operand.vmem [shape: f32[64,8], index: 1, kind: input, shape index: {}]
  %s2 = inlined_call_operand.vmem [shape: f32[64,1], index: 2, kind: input, shape index: {}]
  %s3 = inlined_call_operand.vmem [shape: f32[16,64], index: 3, kind: input, shape index: {}]
  %s4 = inlined_call_operand.vmem [shape: f32[16,1], index: 4, kind: input, shape index: {}]
  %s5 = inlined_call_operand.vmem [shape: f32[2,16], index: 5, kind: input, shape index: {}]
  %s6 = inlined_call_operand.vmem [shape: f32[2,1], index: 6, kind: input, shape index: {}]
  %s7 = inlined_call_operand.hbm [shape: f32[2,256], index: 7, kind: output, shape index: {}]
  %s8 = sld [smem:[#allocation0]]
  $region61: #{tpu_custom_call.1} parent=0
    _
  %s10 = ssub.s32 1, %s8
  %s11 = scalar_select 0, %s10, %s8
  $region1: #{tpu_custom_call.1} parent=0
    #allocation2 [shape = 'u8[2048]{0}', space=vmem, size = 0x800, scoped, tag = 'output window, operand 0']
    #allocation3 [shape = 's32[2]{0}', space=sflag, size = 0x8, scoped, tag = 'scoped memory for tpu_custom_call.1']
    %12 = vsyncpa [#allocation3], 0
    %s13 = scalar_lea.sflag [#allocation3], 1
    %14 = vsyncpa %s13, 0
    loop: start=0, step=1, limit=4
    $region2: #{tpu_custom_call.1} parent=1 // loop_pre_header
      _
    $region3: #{tpu_custom_call.1} parent=1 // loop_header
      %s16 = sphi 0, %s20
      %p17 = scmp.ge.s32.totalorder %s16, 4
      %s26 = sphi 0, %s28
      %s29 = sphi 0, %s26
      %s30 = sphi 0, %s29
      %s46 = sphi 0, %s30
      %s50 = sphi 0, %s50
      %s52 = sphi 0, %s50
      %s53 = sphi 0, %s52
      %s67 = sphi 0, %s53
      %s71 = sphi 0, %s71
      %s73 = sphi 0, %s71
      %s74 = sphi 0, %s73
      %s88 = sphi 0, %s74
      %s92 = sphi 0, %s92
      %s94 = sphi 0, %s92
      %s95 = sphi 0, %s94
      %s109 = sphi 0, %s95
      %s113 = sphi 0, %s113
      %s115 = sphi 0, %s113
      %s116 = sphi 0, %s115
      %s130 = sphi 0, %s116
      %s134 = sphi 0, %s134
      %s136 = sphi 0, %s134
      %s137 = sphi 0, %s136
      %s151 = sphi 0, %s137
      %s155 = sphi 0, %s155
      %s157 = sphi 0, %s155
      %s158 = sphi 0, %s157
      %s172 = sphi 0, %s158
      %s178 = sphi 0, %s180
      %s181 = sphi 0, %s178
      %s182 = sphi 0, %s181
      %s198 = sphi 0, %s182
    $region4: #{tpu_custom_call.1} parent=1 // loop_header_branch
      %19 = sbr.rel (%p17) target = $region8
    $region5: #{tpu_custom_call.1} parent=1 // loop_body
      %s21 = ssub.s32 %s16, 1
      %s22 = ssub.s32 %s16, 2
      %s23 = sadd.s32 %s16, 1
      %s24 = ssub.s32 %s16, %s23
      %p25 = scmp.eq.s32.totalorder %s24, 0
      %s27 = sadd.s32 %s26, 1
      %s28 = scalar_select %p25, %s26, %s27
      %p31 = pneg %p25
      %p32 = scmp.eq.s32.totalorder %s16, 1
      %p33 = por %p31, %p32
      %p34 = scmp.ne.s32.totalorder %s26, %s29
      %p35 = scmp.eq.s32.totalorder %s16, 0
      %p36 = por %p34, %p35
      %p37 = scmp.ne.s32.totalorder %s26, %s29
      %p38 = scmp.eq.s32.totalorder %s21, 1
      %p39 = por %p37, %p38
      %p40 = scmp.ne.s32.totalorder %s29, %s30
      %p41 = scmp.eq.s32.totalorder %s21, 0
      %p42 = por %p40, %p41
      %p43 = scmp.ne.s32.totalorder %s29, %s30
      %p44 = scmp.eq.s32.totalorder %s22, 1
      %p45 = por %p43, %p44
      %p47 = scmp.ne.s32.totalorder %s30, %s46
      %p48 = scmp.eq.s32.totalorder %s22, 0
      %p49 = por %p47, %p48
      %s51 = sadd.s32 %s50, 1
      %p54 = scmp.eq.s32.totalorder %s16, 1
      %p55 = scmp.ne.s32.totalorder %s50, %s52
      %p56 = scmp.eq.s32.totalorder %s16, 0
      %p57 = por %p55, %p56
      %p58 = scmp.ne.s32.totalorder %s50, %s52
      %p59 = scmp.eq.s32.totalorder %s21, 1
      %p60 = por %p58, %p59
      %p61 = scmp.ne.s32.totalorder %s52, %s53
      %p62 = scmp.eq.s32.totalorder %s21, 0
      %p63 = por %p61, %p62
      %p64 = scmp.ne.s32.totalorder %s52, %s53
      %p65 = scmp.eq.s32.totalorder %s22, 1
      %p66 = por %p64, %p65
      %p68 = scmp.ne.s32.totalorder %s53, %s67
      %p69 = scmp.eq.s32.totalorder %s22, 0
      %p70 = por %p68, %p69
      %s72 = sadd.s32 %s71, 1
      %p75 = scmp.eq.s32.totalorder %s16, 1
      %p76 = scmp.ne.s32.totalorder %s71, %s73
      %p77 = scmp.eq.s32.totalorder %s16, 0
      %p78 = por %p76, %p77
      %p79 = scmp.ne.s32.totalorder %s71, %s73
      %p80 = scmp.eq.s32.totalorder %s21, 1
      %p81 = por %p79, %p80
      %p82 = scmp.ne.s32.totalorder %s73, %s74
      %p83 = scmp.eq.s32.totalorder %s21, 0
      %p84 = por %p82, %p83
      %p85 = scmp.ne.s32.totalorder %s73, %s74
      %p86 = scmp.eq.s32.totalorder %s22, 1
      %p87 = por %p85, %p86
      %p89 = scmp.ne.s32.totalorder %s74, %s88
      %p90 = scmp.eq.s32.totalorder %s22, 0
      %p91 = por %p89, %p90
      %s93 = sadd.s32 %s92, 1
      %p96 = scmp.eq.s32.totalorder %s16, 1
      %p97 = scmp.ne.s32.totalorder %s92, %s94
      %p98 = scmp.eq.s32.totalorder %s16, 0
      %p99 = por %p97, %p98
      %p100 = scmp.ne.s32.totalorder %s92, %s94
      %p101 = scmp.eq.s32.totalorder %s21, 1
      %p102 = por %p100, %p101
      %p103 = scmp.ne.s32.totalorder %s94, %s95
      %p104 = scmp.eq.s32.totalorder %s21, 0
      %p105 = por %p103, %p104
      %p106 = scmp.ne.s32.totalorder %s94, %s95
      %p107 = scmp.eq.s32.totalorder %s22, 1
      %p108 = por %p106, %p107
      %p110 = scmp.ne.s32.totalorder %s95, %s109
      %p111 = scmp.eq.s32.totalorder %s22, 0
      %p112 = por %p110, %p111
      %s114 = sadd.s32 %s113, 1
      %p117 = scmp.eq.s32.totalorder %s16, 1
      %p118 = scmp.ne.s32.totalorder %s113, %s115
      %p119 = scmp.eq.s32.totalorder %s16, 0
      %p120 = por %p118, %p119
      %p121 = scmp.ne.s32.totalorder %s113, %s115
      %p122 = scmp.eq.s32.totalorder %s21, 1
      %p123 = por %p121, %p122
      %p124 = scmp.ne.s32.totalorder %s115, %s116
      %p125 = scmp.eq.s32.totalorder %s21, 0
      %p126 = por %p124, %p125
      %p127 = scmp.ne.s32.totalorder %s115, %s116
      %p128 = scmp.eq.s32.totalorder %s22, 1
      %p129 = por %p127, %p128
      %p131 = scmp.ne.s32.totalorder %s116, %s130
      %p132 = scmp.eq.s32.totalorder %s22, 0
      %p133 = por %p131, %p132
      %s135 = sadd.s32 %s134, 1
      %p138 = scmp.eq.s32.totalorder %s16, 1
      %p139 = scmp.ne.s32.totalorder %s134, %s136
      %p140 = scmp.eq.s32.totalorder %s16, 0
      %p141 = por %p139, %p140
      %p142 = scmp.ne.s32.totalorder %s134, %s136
      %p143 = scmp.eq.s32.totalorder %s21, 1
      %p144 = por %p142, %p143
      %p145 = scmp.ne.s32.totalorder %s136, %s137
      %p146 = scmp.eq.s32.totalorder %s21, 0
      %p147 = por %p145, %p146
      %p148 = scmp.ne.s32.totalorder %s136, %s137
      %p149 = scmp.eq.s32.totalorder %s22, 1
      %p150 = por %p148, %p149
      %p152 = scmp.ne.s32.totalorder %s137, %s151
      %p153 = scmp.eq.s32.totalorder %s22, 0
      %p154 = por %p152, %p153
      %s156 = sadd.s32 %s155, 1
      %p159 = scmp.eq.s32.totalorder %s16, 1
      %p160 = scmp.ne.s32.totalorder %s155, %s157
      %p161 = scmp.eq.s32.totalorder %s16, 0
      %p162 = por %p160, %p161
      %p163 = scmp.ne.s32.totalorder %s155, %s157
      %p164 = scmp.eq.s32.totalorder %s21, 1
      %p165 = por %p163, %p164
      %p166 = scmp.ne.s32.totalorder %s157, %s158
      %p167 = scmp.eq.s32.totalorder %s21, 0
      %p168 = por %p166, %p167
      %p169 = scmp.ne.s32.totalorder %s157, %s158
      %p170 = scmp.eq.s32.totalorder %s22, 1
      %p171 = por %p169, %p170
      %p173 = scmp.ne.s32.totalorder %s158, %s172
      %p174 = scmp.eq.s32.totalorder %s22, 0
      %p175 = por %p173, %p174
      %s176 = ssub.s32 %s16, %s23
      %p177 = scmp.eq.s32.totalorder %s176, 0
      %s179 = sadd.s32 %s178, 1
      %s180 = scalar_select %p177, %s178, %s179
      %p183 = pneg %p177
      %p184 = scmp.eq.s32.totalorder %s16, 1
      %p185 = por %p183, %p184
      %p186 = scmp.ne.s32.totalorder %s178, %s181
      %p187 = scmp.eq.s32.totalorder %s16, 0
      %p188 = por %p186, %p187
      %p189 = scmp.ne.s32.totalorder %s178, %s181
      %p190 = scmp.eq.s32.totalorder %s21, 1
      %p191 = por %p189, %p190
      %p192 = scmp.ne.s32.totalorder %s181, %s182
      %p193 = scmp.eq.s32.totalorder %s21, 0
      %p194 = por %p192, %p193
      %p195 = scmp.ne.s32.totalorder %s181, %s182
      %p196 = scmp.eq.s32.totalorder %s22, 1
      %p197 = por %p195, %p196
      %p199 = scmp.ne.s32.totalorder %s182, %s198
      %p200 = scmp.eq.s32.totalorder %s22, 0
      %p201 = por %p199, %p200
      %p202 = scmp.le.s32.totalorder 1, %s16
      %p203 = scmp.lt.s32.totalorder %s16, 3
      %p204 = pnand %p202, %p203
      %p205 = pneg %p204
      // Predicated region
      $region9: #{tpu_custom_call.1} parent=5 // pred_check
        _
      $region10: #{tpu_custom_call.1} parent=5 // pred_check_branch
        %207 = sbr.rel (%p204) target = $region12
      $region11: #{tpu_custom_call.1} parent=5 // pred_region
        %s208 = ssub.s32 %s16, 1
        // Predicated region
        $region13: #{tpu_custom_call.1} parent=11 // pred_check
          %p209 = pneg %p63
        $region14: #{tpu_custom_call.1} parent=11 // pred_check_branch
          %211 = sbr.rel (%p209) target = $region16
        $region15: #{tpu_custom_call.1} parent=11 // pred_region
          _
        $region16: #{tpu_custom_call.1} parent=11 // pred_fallthru
          _
        // Predicated region
        $region17: #{tpu_custom_call.1} parent=11 // pred_check
          %p212 = pneg %p84
        $region18: #{tpu_custom_call.1} parent=11 // pred_check_branch
          %214 = sbr.rel (%p212) target = $region20
        $region19: #{tpu_custom_call.1} parent=11 // pred_region
          _
        $region20: #{tpu_custom_call.1} parent=11 // pred_fallthru
          _
        // Predicated region
        $region21: #{tpu_custom_call.1} parent=11 // pred_check
          %p215 = pneg %p105
        $region22: #{tpu_custom_call.1} parent=11 // pred_check_branch
          %217 = sbr.rel (%p215) target = $region24
        $region23: #{tpu_custom_call.1} parent=11 // pred_region
          _
        $region24: #{tpu_custom_call.1} parent=11 // pred_fallthru
          _
        // Predicated region
        $region25: #{tpu_custom_call.1} parent=11 // pred_check
          %p218 = pneg %p126
        $region26: #{tpu_custom_call.1} parent=11 // pred_check_branch
          %220 = sbr.rel (%p218) target = $region28
        $region27: #{tpu_custom_call.1} parent=11 // pred_region
          _
        $region28: #{tpu_custom_call.1} parent=11 // pred_fallthru
          _
        // Predicated region
        $region29: #{tpu_custom_call.1} parent=11 // pred_check
          %p221 = pneg %p147
        $region30: #{tpu_custom_call.1} parent=11 // pred_check_branch
          %223 = sbr.rel (%p221) target = $region32
        $region31: #{tpu_custom_call.1} parent=11 // pred_region
          _
        $region32: #{tpu_custom_call.1} parent=11 // pred_fallthru
          _
        // Predicated region
        $region33: #{tpu_custom_call.1} parent=11 // pred_check
          %p224 = pneg %p168
        $region34: #{tpu_custom_call.1} parent=11 // pred_check_branch
          %226 = sbr.rel (%p224) target = $region36
        $region35: #{tpu_custom_call.1} parent=11 // pred_region
          _
        $region36: #{tpu_custom_call.1} parent=11 // pred_fallthru
          _
      $region12: #{tpu_custom_call.1} parent=5 // pred_fallthru
        _
      %p227 = scmp.lt.s32.totalorder %s16, 2
      // Predicated region
      $region37: #{tpu_custom_call.1} parent=5 // pred_check
        %p228 = pneg %p227
      $region38: #{tpu_custom_call.1} parent=5 // pred_check_branch
        %230 = sbr.rel (%p228) target = $region40
      $region39: #{tpu_custom_call.1} parent=5 // pred_region
        // Predicated region
        $region41: #{tpu_custom_call.1} parent=39 // pred_check
          %p231 = pneg %p36
        $region42: #{tpu_custom_call.1} parent=39 // pred_check_branch
          %233 = sbr.rel (%p231) target = $region44
        $region43: #{tpu_custom_call.1} parent=39 // pred_region
          %p234 = scmp.lt.s32.totalorder %s16, 1
          %s235 = scalar_select %p234, %s16, 1
          %s236 = smul.addr %s235, 8
          %s237 = scalar_lea.vmem %s0, %s236
        $region44: #{tpu_custom_call.1} parent=39 // pred_fallthru
          _
      $region40: #{tpu_custom_call.1} parent=5 // pred_fallthru
        _
      %p238 = scmp.le.s32.totalorder 1, %s16
      %p239 = scmp.lt.s32.totalorder %s16, 3
      %p240 = pnand %p238, %p239
      %p241 = pneg %p240
      // Predicated region
      $region45: #{tpu_custom_call.1} parent=5 // pred_check
        _
      $region46: #{tpu_custom_call.1} parent=5 // pred_check_branch
        %243 = sbr.rel (%p240) target = $region48
      $region47: #{tpu_custom_call.1} parent=5 // pred_region
        %s244 = ssub.s32 %s16, 1
        %p245 = scmp.lt.s32.totalorder %s21, 1
        %s246 = scalar_select %p245, %s21, 1
        %s247 = smul.addr %s246, 8
        %s248 = scalar_lea.vmem %s0, %s247
        %p249 = pneg %p42
        %p250 = pneg %p39
        %p251 = pneg %p63
        %p252 = pneg %p60
        %p253 = pneg %p84
        %p254 = pneg %p81
        %p255 = pneg %p105
        %p256 = pneg %p102
        %p257 = pneg %p126
        %p258 = pneg %p123
        %p259 = pneg %p147
        %p260 = pneg %p144
        %p261 = pneg %p168
        %p262 = pneg %p165
        %p263 = pneg %p194
        %p264 = pneg %p191
        %s265 = sand.u32 %s181, 1
        %s266 = scalar_lea.sflag [#allocation3], %s265
        %s267 = sand.u32 %s181, 1
        %s268 = smul.addr %s267, 2
        %s269 = scalar_lea.vmem [#allocation2], %s268
        %p270 = scmp.lt.s32.totalorder %s21, 1
        %s271 = scalar_select %p270, %s21, 1
        %s272 = smul.addr %s271, 8
        %s273 = scalar_lea.vmem %s0, %s272
        %v274 = vld [vmem:[%s273] sm:$0xff]
        %v275 = vld [vmem:[%s1] sm:$0xff]
        %v276 = vld [vmem:[%s1 + $0x8] sm:$0xff]
        %v277 = vld [vmem:[%s1 + $0x10] sm:$0xff]
        %v278 = vld [vmem:[%s1 + $0x18] sm:$0xff]
        %v279 = vld [vmem:[%s1 + $0x20] sm:$0xff]
        %v280 = vld [vmem:[%s1 + $0x28] sm:$0xff]
        %v281 = vld [vmem:[%s1 + $0x30] sm:$0xff]
        %v282 = vld [vmem:[%s1 + $0x38] sm:$0xff]
        %v283 = vld [vmem:[%s2] sm:$0xff]
        %v284 = vld [vmem:[%s2 + $0x8] sm:$0xff]
        %v285 = vld [vmem:[%s2 + $0x10] sm:$0xff]
        %v286 = vld [vmem:[%s2 + $0x18] sm:$0xff]
        %v287 = vld [vmem:[%s2 + $0x20] sm:$0xff]
        %v288 = vld [vmem:[%s2 + $0x28] sm:$0xff]
        %v289 = vld [vmem:[%s2 + $0x30] sm:$0xff]
        %v290 = vld [vmem:[%s2 + $0x38] sm:$0xff]
        %292 = vset.pattern.permute.xlu0 0
        %293 = vperm.xlu0 %292, %v283
        %v294 = vpop.permute.xlu0 %293
        %297 = vset.pattern.permute.xlu0 0
        %298 = vperm.xlu0 %297, %v284
        %v299 = vpop.permute.xlu0 %298
        %302 = vset.pattern.permute.xlu0 0
        %303 = vperm.xlu0 %302, %v285
        %v304 = vpop.permute.xlu0 %303
        %307 = vset.pattern.permute.xlu0 0
        %308 = vperm.xlu0 %307, %v286
        %v309 = vpop.permute.xlu0 %308
        %312 = vset.pattern.permute.xlu0 0
        %313 = vperm.xlu0 %312, %v287
        %v314 = vpop.permute.xlu0 %313
        %317 = vset.pattern.permute.xlu0 0
        %318 = vperm.xlu0 %317, %v288
        %v319 = vpop.permute.xlu0 %318
        %322 = vset.pattern.permute.xlu0 0
        %323 = vperm.xlu0 %322, %v289
        %v324 = vpop.permute.xlu0 %323
        %327 = vset.pattern.permute.xlu0 0
        %328 = vperm.xlu0 %327, %v290
        %v329 = vpop.permute.xlu0 %328
        %vm331 = vcmask 64512
        %v333 = vsel %vm331, %v275, 0
        %v336 = vsel %vm331, %v276, 0
        %v339 = vsel %vm331, %v277, 0
        %v342 = vsel %vm331, %v278, 0
        %v345 = vsel %vm331, %v279, 0
        %v348 = vsel %vm331, %v280, 0
        %v351 = vsel %vm331, %v281, 0
        %v354 = vsel %vm331, %v282, 0
        %356 = vmatprep.subr.mxu0 0.0
        %v357 = vand.u32 %v274, 4294901760
        %358 = vmatpush1.msra.mxu0 %v357
        %359 = vmatprep.subr.mxu0 0.0
        %360 = vmatpush1.msra.mxu0 0.0
        %361 = vmatprep.subr.mxu0 0.0
        %362 = vmatpush1.msra.mxu0 0.0
        %363 = vmatprep.subr.mxu0 0.0
        %364 = vmatpush1.msra.mxu0 0.0
        %365 = vmatprep.subr.mxu0 0.0
        %366 = vmatpush1.msra.mxu0 0.0
        %367 = vmatprep.subr.mxu0 0.0
        %368 = vmatpush1.msra.mxu0 0.0
        %369 = vmatprep.subr.mxu0 0.0
        %370 = vmatpush1.msra.mxu0 0.0
        %371 = vmatprep.subr.mxu0 0.0
        %372 = vmatpush1.msra.mxu0 0.0
        %373 = vmatprep.subr.mxu0 0.0
        %374 = vmatpush1.msra.mxu0 0.0
        %375 = vmatprep.subr.mxu0 0.0
        %376 = vmatpush1.msra.mxu0 0.0
        %377 = vmatprep.subr.mxu0 0.0
        %378 = vmatpush1.msra.mxu0 0.0
        %379 = vmatprep.subr.mxu0 0.0
        %380 = vmatpush1.msra.mxu0 0.0
        %381 = vmatprep.subr.mxu0 0.0
        %382 = vmatpush1.msra.mxu0 0.0
        %383 = vmatprep.subr.mxu0 0.0
        %384 = vmatpush1.msra.mxu0 0.0
        %385 = vmatprep.subr.mxu0 0.0
        %386 = vmatpush1.msra.mxu0 0.0
        %387 = vmatprep.subr.mxu0 0.0
        %388 = vmatpush1.msra.mxu0 0.0
        %389 = vmatprep.subr.mxu0 0.0
        %390 = vmatpush1.msra.mxu0 0.0
        %391 = vmatprep.subr.mxu0 0.0
        %392 = vmatpush1.msra.mxu0 0.0
        %393 = vmatprep.subr.mxu0 0.0
        %394 = vmatpush1.msra.mxu0 0.0
        %395 = vmatprep.subr.mxu0 0.0
        %396 = vmatpush1.msra.mxu0 0.0
        %397 = vmatprep.subr.mxu0 0.0
        %398 = vmatpush1.msra.mxu0 0.0
        %399 = vmatprep.subr.mxu0 0.0
        %400 = vmatpush1.msra.mxu0 0.0
        %401 = vmatprep.subr.mxu0 0.0
        %402 = vmatpush1.msra.mxu0 0.0
        %403 = vmatprep.subr.mxu0 0.0
        %404 = vmatpush1.msra.mxu0 0.0
        %405 = vmatprep.subr.mxu0 0.0
        %406 = vmatpush1.msra.mxu0 0.0
        %407 = vmatprep.subr.mxu0 0.0
        %408 = vmatpush1.msra.mxu0 0.0
        %409 = vmatprep.subr.mxu0 0.0
        %410 = vmatpush1.msra.mxu0 0.0
        %411 = vmatprep.subr.mxu0 0.0
        %412 = vmatpush1.msra.mxu0 0.0
        %413 = vmatprep.subr.mxu0 0.0
        %414 = vmatpush1.msra.mxu0 0.0
        %415 = vmatprep.subr.mxu0 0.0
        %416 = vmatpush1.msra.mxu0 0.0
        %417 = vmatprep.subr.mxu0 0.0
        %418 = vmatpush1.msra.mxu0 0.0
        %419 = vmatprep.subr.mxu0 0.0
        %420 = vmatpush1.msra.mxu0 0.0
        %421 = vmatprep.mubr.f32.mxu0 0.0
        %v422 = vand.u32 %v333, 4294901760
        %v423 = vsub.f32 %v333, %v422
        %v424 = vand.u32 %v423, 4294901760
        %v425 = vsub.f32 %v423, %v424
        %v426 = vand.u32 %v425, 4294901760
        %427 = vmatmul.mubr.f32.gmra.mrb[0].mxu0 %v426
        %v428 = vpop.f32.mrb[0].mxu0
        %v429 = vadd.f32 %v294, %v428
        %v430 = vpop.f32.mrb[0].mxu0
        %431 = vmatprep.mubr.f32.mxu0 0.0
        %v432 = vand.u32 %v336, 4294901760
        %v433 = vsub.f32 %v336, %v432
        %v434 = vand.u32 %v433, 4294901760
        %v435 = vsub.f32 %v433, %v434
        %v436 = vand.u32 %v435, 4294901760
        %437 = vmatmul.mubr.f32.gmra.mrb[0].mxu0 %v436
        %v438 = vpop.f32.mrb[0].mxu0
        %v439 = vadd.f32 %v299, %v438
        %v440 = vpop.f32.mrb[0].mxu0
        %441 = vmatprep.mubr.f32.mxu0 0.0
        %v442 = vand.u32 %v339, 4294901760
        %v443 = vsub.f32 %v339, %v442
        %v444 = vand.u32 %v443, 4294901760
        %v445 = vsub.f32 %v443, %v444
        %v446 = vand.u32 %v445, 4294901760
        %447 = vmatmul.mubr.f32.gmra.mrb[0].mxu0 %v446
        %v448 = vpop.f32.mrb[0].mxu0
        %v449 = vadd.f32 %v304, %v448
        %v450 = vpop.f32.mrb[0].mxu0
        %451 = vmatprep.mubr.f32.mxu0 0.0
        %v452 = vand.u32 %v342, 4294901760
        %v453 = vsub.f32 %v342, %v452
        %v454 = vand.u32 %v453, 4294901760
        %v455 = vsub.f32 %v453, %v454
        %v456 = vand.u32 %v455, 4294901760
        %457 = vmatmul.mubr.f32.gmra.mrb[0].mxu0 %v456
        %v458 = vpop.f32.mrb[0].mxu0
        %v459 = vadd.f32 %v309, %v458
        %v460 = vpop.f32.mrb[0].mxu0
        %461 = vmatprep.mubr.f32.mxu0 0.0
        %v462 = vand.u32 %v345, 4294901760
        %v463 = vsub.f32 %v345, %v462
        %v464 = vand.u32 %v463, 4294901760
        %v465 = vsub.f32 %v463, %v464
        %v466 = vand.u32 %v465, 4294901760
        %467 = vmatmul.mubr.f32.gmra.mrb[0].mxu0 %v466
        %v468 = vpop.f32.mrb[0].mxu0
        %v469 = vadd.f32 %v314, %v468
        %v470 = vpop.f32.mrb[0].mxu0
        %471 = vmatprep.mubr.f32.mxu0 0.0
        %v472 = vand.u32 %v348, 4294901760
        %v473 = vsub.f32 %v348, %v472
        %v474 = vand.u32 %v473, 4294901760
        %v475 = vsub.f32 %v473, %v474
        %v476 = vand.u32 %v475, 4294901760
        %477 = vmatmul.mubr.f32.gmra.mrb[0].mxu0 %v476
        %v478 = vpop.f32.mrb[0].mxu0
        %v479 = vadd.f32 %v319, %v478
        %v480 = vpop.f32.mrb[0].mxu0
        %481 = vmatprep.mubr.f32.mxu0 0.0
        %v482 = vand.u32 %v351, 4294901760
        %v483 = vsub.f32 %v351, %v482
        %v484 = vand.u32 %v483, 4294901760
        %v485 = vsub.f32 %v483, %v484
        %v486 = vand.u32 %v485, 4294901760
        %487 = vmatmul.mubr.f32.gmra.mrb[0].mxu0 %v486
        %v488 = vpop.f32.mrb[0].mxu0
        %v489 = vadd.f32 %v324, %v488
        %v490 = vpop.f32.mrb[0].mxu0
        %491 = vmatprep.mubr.f32.mxu0 0.0
        %v492 = vand.u32 %v354, 4294901760
        %v493 = vsub.f32 %v354, %v492
        %v494 = vand.u32 %v493, 4294901760
        %v495 = vsub.f32 %v493, %v494
        %v496 = vand.u32 %v495, 4294901760
        %497 = vmatmul.mubr.f32.gmra.mrb[0].mxu0 %v496
        %v498 = vpop.f32.mrb[0].mxu0
        %v499 = vadd.f32 %v329, %v498
        %v500 = vpop.f32.mrb[0].mxu0
        %501 = vdwg.mxu0
        %502 = vmatprep.subr.mxu0 0.0
        %v503 = vand.u32 %v274, 4294901760
        %v504 = vsub.f32 %v274, %v503
        %v505 = vand.u32 %v504, 4294901760
        %v506 = vsub.f32 %v504, %v505
        %v507 = vand.u32 %v506, 4294901760
        %508 = vmatpush1.msra.mxu0 %v507
        %509 = vmatprep.subr.mxu0 0.0
        %510 = vmatpush1.msra.mxu0 0.0
        %511 = vmatprep.subr.mxu0 0.0
        %512 = vmatpush1.msra.mxu0 0.0
        %513 = vmatprep.subr.mxu0 0.0
        %514 = vmatpush1.msra.mxu0 0.0
        %515 = vmatprep.subr.mxu0 0.0
        %516 = vmatpush1.msra.mxu0 0.0
        %517 = vmatprep.subr.mxu0 0.0
        %518 = vmatpush1.msra.mxu0 0.0
        %519 = vmatprep.subr.mxu0 0.0
        %520 = vmatpush1.msra.mxu0 0.0
        %521 = vmatprep.subr.mxu0 0.0
        %522 = vmatpush1.msra.mxu0 0.0
        %523 = vmatprep.subr.mxu0 0.0
        %524 = vmatpush1.msra.mxu0 0.0
        %525 = vmatprep.subr.mxu0 0.0
        %526 = vmatpush1.msra.mxu0 0.0
        %527 = vmatprep.subr.mxu0 0.0
        %528 = vmatpush1.msra.mxu0 0.0
        %529 = vmatprep.subr.mxu0 0.0
        %530 = vmatpush1.msra.mxu0 0.0
        %531 = vmatprep.subr.mxu0 0.0
        %532 = vmatpush1.msra.mxu0 0.0
        %533 = vmatprep.subr.mxu0 0.0
        %534 = vmatpush1.msra.mxu0 0.0
        %535 = vmatprep.subr.mxu0 0.0
        %536 = vmatpush1.msra.mxu0 0.0
        %537 = vmatprep.subr.mxu0 0.0
        %538 = vmatpush1.msra.mxu0 0.0
        %539 = vmatprep.subr.mxu0 0.0
        %540 = vmatpush1.msra.mxu0 0.0
        %541 = vmatprep.subr.mxu0 0.0
        %542 = vmatpush1.msra.mxu0 0.0
        %543 = vmatprep.subr.mxu0 0.0
        %544 = vmatpush1.msra.mxu0 0.0
        %545 = vmatprep.subr.mxu0 0.0
        %546 = vmatpush1.msra.mxu0 0.0
        %547 = vmatprep.subr.mxu0 0.0
        %548 = vmatpush1.msra.mxu0 0.0
        %549 = vmatprep.subr.mxu0 0.0
        %550 = vmatpush1.msra.mxu0 0.0
        %551 = vmatprep.subr.mxu0 0.0
        %552 = vmatpush1.msra.mxu0 0.0
        %553 = vmatprep.subr.mxu0 0.0
        %554 = vmatpush1.msra.mxu0 0.0
        %555 = vmatprep.subr.mxu0 0.0
        %556 = vmatpush1.msra.mxu0 0.0
        %557 = vmatprep.subr.mxu0 0.0
        %558 = vmatpush1.msra.mxu0 0.0
        %559 = vmatprep.subr.mxu0 0.0
        %560 = vmatpush1.msra.mxu0 0.0
        %561 = vmatprep.subr.mxu0 0.0
        %562 = vmatpush1.msra.mxu0 0.0
        %563 = vmatprep.subr.mxu0 0.0
        %564 = vmatpush1.msra.mxu0 0.0
        %565 = vmatprep.subr.mxu0 0.0
        %566 = vmatpush1.msra.mxu0 0.0
        %567 = vmatprep.subr.mxu0 0.0
        %568 = vmatpush1.msra.mxu0 0.0
        %569 = vmatprep.subr.mxu0 0.0
        %570 = vmatpush1.msra.mxu0 0.0
        %571 = vmatprep.mubr.f32.mxu0 0.0
        %v572 = vand.u32 %v333, 4294901760
        %573 = vmatmul.mubr.f32.gmra.mrb[0].mxu0 %v572
        %v574 = vpop.f32.mrb[0].mxu0
        %v575 = vadd.f32 %v429, %v574
        %v576 = vpop.f32.mrb[0].mxu0
        %577 = vmatprep.mubr.f32.mxu0 0.0
        %v578 = vand.u32 %v336, 4294901760
        %579 = vmatmul.mubr.f32.gmra.mrb[0].mxu0 %v578
        %v580 = vpop.f32.mrb[0].mxu0
        %v581 = vadd.f32 %v439, %v580
        %v582 = vpop.f32.mrb[0].mxu0
        %583 = vmatprep.mubr.f32.mxu0 0.0
        %v584 = vand.u32 %v339, 4294901760
        %585 = vmatmul.mubr.f32.gmra.mrb[0].mxu0 %v584
        %v586 = vpop.f32.mrb[0].mxu0
        %v587 = vadd.f32 %v449, %v586
        %v588 = vpop.f32.mrb[0].mxu0
        %589 = vmatprep.mubr.f32.mxu0 0.0
        %v590 = vand.u32 %v342, 4294901760
        %591 = vmatmul.mubr.f32.gmra.mrb[0].mxu0 %v590
        %v592 = vpop.f32.mrb[0].mxu0
        %v593 = vadd.f32 %v459, %v592
        %v594 = vpop.f32.mrb[0].mxu0
        %595 = vmatprep.mubr.f32.mxu0 0.0
        %v596 = vand.u32 %v345, 4294901760
        %597 = vmatmul.mubr.f32.gmra.mrb[0].mxu0 %v596
        %v598 = vpop.f32.mrb[0].mxu0
        %v599 = vadd.f32 %v469, %v598
        %v600 = vpop.f32.mrb[0].mxu0
        %601 = vmatprep.mubr.f32.mxu0 0.0
        %v602 = vand.u32 %v348, 4294901760
        %603 = vmatmul.mubr.f32.gmra.mrb[0].mxu0 %v602
        %v604 = vpop.f32.mrb[0].mxu0
        %v605 = vadd.f32 %v479, %v604
        %v606 = vpop.f32.mrb[0].mxu0
        %607 = vmatprep.mubr.f32.mxu0 0.0
        %v608 = vand.u32 %v351, 4294901760
        %609 = vmatmul.mubr.f32.gmra.mrb[0].mxu0 %v608
        %v610 = vpop.f32.mrb[0].mxu0
        %v611 = vadd.f32 %v489, %v610
        %v612 = vpop.f32.mrb[0].mxu0
        %613 = vmatprep.mubr.f32.mxu0 0.0
        %v614 = vand.u32 %v354, 4294901760
        %615 = vmatmul.mubr.f32.gmra.mrb[0].mxu0 %v614
        %v616 = vpop.f32.mrb[0].mxu0
        %v617 = vadd.f32 %v499, %v616
        %v618 = vpop.f32.mrb[0].mxu0
        %619 = vdwg.mxu0
        %620 = vmatprep.subr.mxu0 0.0
        %v621 = vand.u32 %v274, 4294901760
        %v622 = vsub.f32 %v274, %v621
        %623 = vmatpush1.msra.mxu0 %v622
        %624 = vmatprep.subr.mxu0 0.0
        %625 = vmatpush1.msra.mxu0 0.0
        %626 = vmatprep.subr.mxu0 0.0
        %627 = vmatpush1.msra.mxu0 0.0
        %628 = vmatprep.subr.mxu0 0.0
        %629 = vmatpush1.msra.mxu0 0.0
        %630 = vmatprep.subr.mxu0 0.0
        %631 = vmatpush1.msra.mxu0 0.0
        %632 = vmatprep.subr.mxu0 0.0
        %633 = vmatpush1.msra.mxu0 0.0
        %634 = vmatprep.subr.mxu0 0.0
        %635 = vmatpush1.msra.mxu0 0.0
        %636 = vmatprep.subr.mxu0 0.0
        %637 = vmatpush1.msra.mxu0 0.0
        %638 = vmatprep.subr.mxu0 0.0
        %639 = vmatpush1.msra.mxu0 0.0
        %640 = vmatprep.subr.mxu0 0.0
        %641 = vmatpush1.msra.mxu0 0.0
        %642 = vmatprep.subr.mxu0 0.0
        %643 = vmatpush1.msra.mxu0 0.0
        %644 = vmatprep.subr.mxu0 0.0
        %645 = vmatpush1.msra.mxu0 0.0
        %646 = vmatprep.subr.mxu0 0.0
        %647 = vmatpush1.msra.mxu0 0.0
        %648 = vmatprep.subr.mxu0 0.0
        %649 = vmatpush1.msra.mxu0 0.0
        %650 = vmatprep.subr.mxu0 0.0
        %651 = vmatpush1.msra.mxu0 0.0
        %652 = vmatprep.subr.mxu0 0.0
        %653 = vmatpush1.msra.mxu0 0.0
        %654 = vmatprep.subr.mxu0 0.0
        %655 = vmatpush1.msra.mxu0 0.0
        %656 = vmatprep.subr.mxu0 0.0
        %657 = vmatpush1.msra.mxu0 0.0
        %658 = vmatprep.subr.mxu0 0.0
        %659 = vmatpush1.msra.mxu0 0.0
        %660 = vmatprep.subr.mxu0 0.0
        %661 = vmatpush1.msra.mxu0 0.0
        %662 = vmatprep.subr.mxu0 0.0
        %663 = vmatpush1.msra.mxu0 0.0
        %664 = vmatprep.subr.mxu0 0.0
        %665 = vmatpush1.msra.mxu0 0.0
        %666 = vmatprep.subr.mxu0 0.0
        %667 = vmatpush1.msra.mxu0 0.0
        %668 = vmatprep.subr.mxu0 0.0
        %669 = vmatpush1.msra.mxu0 0.0
        %670 = vmatprep.subr.mxu0 0.0
        %671 = vmatpush1.msra.mxu0 0.0
        %672 = vmatprep.subr.mxu0 0.0
        %673 = vmatpush1.msra.mxu0 0.0
        %674 = vmatprep.subr.mxu0 0.0
        %675 = vmatpush1.msra.mxu0 0.0
        %676 = vmatprep.subr.mxu0 0.0
        %677 = vmatpush1.msra.mxu0 0.0
        %678 = vmatprep.subr.mxu0 0.0
        %679 = vmatpush1.msra.mxu0 0.0
        %680 = vmatprep.subr.mxu0 0.0
        %681 = vmatpush1.msra.mxu0 0.0
        %682 = vmatprep.subr.mxu0 0.0
        %683 = vmatpush1.msra.mxu0 0.0
        %684 = vmatprep.subr.mxu0 0.0
        %685 = vmatpush1.msra.mxu0 0.0
        %686 = vmatprep.mubr.f32.mxu0 0.0
        %v687 = vand.u32 %v333, 4294901760
        %v688 = vsub.f32 %v333, %v687
        %689 = vmatmul.mubr.f32.gmra.mrb[0].mxu0 %v688
        %v690 = vpop.f32.mrb[0].mxu0
        %v691 = vadd.f32 %v575, %v690
        %v692 = vpop.f32.mrb[0].mxu0
        %693 = vmatprep.mubr.f32.mxu0 0.0
        %v694 = vand.u32 %v336, 4294901760
        %v695 = vsub.f32 %v336, %v694
        %696 = vmatmul.mubr.f32.gmra.mrb[0].mxu0 %v695
        %v697 = vpop.f32.mrb[0].mxu0
        %v698 = vadd.f32 %v581, %v697
        %v699 = vpop.f32.mrb[0].mxu0
        %700 = vmatprep.mubr.f32.mxu0 0.0
        %v701 = vand.u32 %v339, 4294901760
        %v702 = vsub.f32 %v339, %v701
        %703 = vmatmul.mubr.f32.gmra.mrb[0].mxu0 %v702
        %v704 = vpop.f32.mrb[0].mxu0
        %v705 = vadd.f32 %v587, %v704
        %v706 = vpop.f32.mrb[0].mxu0
        %707 = vmatprep.mubr.f32.mxu0 0.0
        %v708 = vand.u32 %v342, 4294901760
        %v709 = vsub.f32 %v342, %v708
        %710 = vmatmul.mubr.f32.gmra.mrb[0].mxu0 %v709
        %v711 = vpop.f32.mrb[0].mxu0
        %v712 = vadd.f32 %v593, %v711
        %v713 = vpop.f32.mrb[0].mxu0
        %714 = vmatprep.mubr.f32.mxu0 0.0
        %v715 = vand.u32 %v345, 4294901760
        %v716 = vsub.f32 %v345, %v715
        %717 = vmatmul.mubr.f32.gmra.mrb[0].mxu0 %v716
        %v718 = vpop.f32.mrb[0].mxu0
        %v719 = vadd.f32 %v599, %v718
        %v720 = vpop.f32.mrb[0].mxu0
        %721 = vmatprep.mubr.f32.mxu0 0.0
        %v722 = vand.u32 %v348, 4294901760
        %v723 = vsub.f32 %v348, %v722
        %724 = vmatmul.mubr.f32.gmra.mrb[0].mxu0 %v723
        %v725 = vpop.f32.mrb[0].mxu0
        %v726 = vadd.f32 %v605, %v725
        %v727 = vpop.f32.mrb[0].mxu0
        %728 = vmatprep.mubr.f32.mxu0 0.0
        %v729 = vand.u32 %v351, 4294901760
        %v730 = vsub.f32 %v351, %v729
        %731 = vmatmul.mubr.f32.gmra.mrb[0].mxu0 %v730
        %v732 = vpop.f32.mrb[0].mxu0
        %v733 = vadd.f32 %v611, %v732
        %v734 = vpop.f32.mrb[0].mxu0
        %735 = vmatprep.mubr.f32.mxu0 0.0
        %v736 = vand.u32 %v354, 4294901760
        %v737 = vsub.f32 %v354, %v736
        %738 = vmatmul.mubr.f32.gmra.mrb[0].mxu0 %v737
        %v739 = vpop.f32.mrb[0].mxu0
        %v740 = vadd.f32 %v617, %v739
        %v741 = vpop.f32.mrb[0].mxu0
        %742 = vdwg.mxu0
        %743 = vmatprep.subr.mxu0 0.0
        %v744 = vand.u32 %v274, 4294901760
        %745 = vmatpush1.msra.mxu0 %v744
        %746 = vmatprep.subr.mxu0 0.0
        %747 = vmatpush1.msra.mxu0 0.0
        %748 = vmatprep.subr.mxu0 0.0
        %749 = vmatpush1.msra.mxu0 0.0
        %750 = vmatprep.subr.mxu0 0.0
        %751 = vmatpush1.msra.mxu0 0.0
        %752 = vmatprep.subr.mxu0 0.0
        %753 = vmatpush1.msra.mxu0 0.0
        %754 = vmatprep.subr.mxu0 0.0
        %755 = vmatpush1.msra.mxu0 0.0
        %756 = vmatprep.subr.mxu0 0.0
        %757 = vmatpush1.msra.mxu0 0.0
        %758 = vmatprep.subr.mxu0 0.0
        %759 = vmatpush1.msra.mxu0 0.0
        %760 = vmatprep.subr.mxu0 0.0
        %761 = vmatpush1.msra.mxu0 0.0
        %762 = vmatprep.subr.mxu0 0.0
        %763 = vmatpush1.msra.mxu0 0.0
        %764 = vmatprep.subr.mxu0 0.0
        %765 = vmatpush1.msra.mxu0 0.0
        %766 = vmatprep.subr.mxu0 0.0
        %767 = vmatpush1.msra.mxu0 0.0
        %768 = vmatprep.subr.mxu0 0.0
        %769 = vmatpush1.msra.mxu0 0.0
        %770 = vmatprep.subr.mxu0 0.0
        %771 = vmatpush1.msra.mxu0 0.0
        %772 = vmatprep.subr.mxu0 0.0
        %773 = vmatpush1.msra.mxu0 0.0
        %774 = vmatprep.subr.mxu0 0.0
        %775 = vmatpush1.msra.mxu0 0.0
        %776 = vmatprep.subr.mxu0 0.0
        %777 = vmatpush1.msra.mxu0 0.0
        %778 = vmatprep.subr.mxu0 0.0
        %779 = vmatpush1.msra.mxu0 0.0
        %780 = vmatprep.subr.mxu0 0.0
        %781 = vmatpush1.msra.mxu0 0.0
        %782 = vmatprep.subr.mxu0 0.0
        %783 = vmatpush1.msra.mxu0 0.0
        %784 = vmatprep.subr.mxu0 0.0
        %785 = vmatpush1.msra.mxu0 0.0
        %786 = vmatprep.subr.mxu0 0.0
        %787 = vmatpush1.msra.mxu0 0.0
        %788 = vmatprep.subr.mxu0 0.0
        %789 = vmatpush1.msra.mxu0 0.0
        %790 = vmatprep.subr.mxu0 0.0
        %791 = vmatpush1.msra.mxu0 0.0
        %792 = vmatprep.subr.mxu0 0.0
        %793 = vmatpush1.msra.mxu0 0.0
        %794 = vmatprep.subr.mxu0 0.0
        %795 = vmatpush1.msra.mxu0 0.0
        %796 = vmatprep.subr.mxu0 0.0
        %797 = vmatpush1.msra.mxu0 0.0
        %798 = vmatprep.subr.mxu0 0.0
        %799 = vmatpush1.msra.mxu0 0.0
        %800 = vmatprep.subr.mxu0 0.0
        %801 = vmatpush1.msra.mxu0 0.0
        %802 = vmatprep.subr.mxu0 0.0
        %803 = vmatpush1.msra.mxu0 0.0
        %804 = vmatprep.subr.mxu0 0.0
        %805 = vmatpush1.msra.mxu0 0.0
        %806 = vmatprep.subr.mxu0 0.0
        %807 = vmatpush1.msra.mxu0 0.0
        %808 = vmatprep.mubr.f32.mxu0 0.0
        %v809 = vand.u32 %v333, 4294901760
        %v810 = vsub.f32 %v333, %v809
        %v811 = vand.u32 %v810, 4294901760
        %812 = vmatmul.mubr.f32.gmra.mrb[0].mxu0 %v811
        %v813 = vpop.f32.mrb[0].mxu0
        %v814 = vadd.f32 %v691, %v813
        %v815 = vpop.f32.mrb[0].mxu0
        %816 = vmatprep.mubr.f32.mxu0 0.0
        %v817 = vand.u32 %v336, 4294901760
        %v818 = vsub.f32 %v336, %v817
        %v819 = vand.u32 %v818, 4294901760
        %820 = vmatmul.mubr.f32.gmra.mrb[0].mxu0 %v819
        %v821 = vpop.f32.mrb[0].mxu0
        %v822 = vadd.f32 %v698, %v821
        %v823 = vpop.f32.mrb[0].mxu0
        %824 = vmatprep.mubr.f32.mxu0 0.0
        %v825 = vand.u32 %v339, 4294901760
        %v826 = vsub.f32 %v339, %v825
        %v827 = vand.u32 %v826, 4294901760
        %828 = vmatmul.mubr.f32.gmra.mrb[0].mxu0 %v827
        %v829 = vpop.f32.mrb[0].mxu0
        %v830 = vadd.f32 %v705, %v829
        %v831 = vpop.f32.mrb[0].mxu0
        %832 = vmatprep.mubr.f32.mxu0 0.0
        %v833 = vand.u32 %v342, 4294901760
        %v834 = vsub.f32 %v342, %v833
        %v835 = vand.u32 %v834, 4294901760
        %836 = vmatmul.mubr.f32.gmra.mrb[0].mxu0 %v835
        %v837 = vpop.f32.mrb[0].mxu0
        %v838 = vadd.f32 %v712, %v837
        %v839 = vpop.f32.mrb[0].mxu0
        %840 = vmatprep.mubr.f32.mxu0 0.0
        %v841 = vand.u32 %v345, 4294901760
        %v842 = vsub.f32 %v345, %v841
        %v843 = vand.u32 %v842, 4294901760
        %844 = vmatmul.mubr.f32.gmra.mrb[0].mxu0 %v843
        %v845 = vpop.f32.mrb[0].mxu0
        %v846 = vadd.f32 %v719, %v845
        %v847 = vpop.f32.mrb[0].mxu0
        %848 = vmatprep.mubr.f32.mxu0 0.0
        %v849 = vand.u32 %v348, 4294901760
        %v850 = vsub.f32 %v348, %v849
        %v851 = vand.u32 %v850, 4294901760
        %852 = vmatmul.mubr.f32.gmra.mrb[0].mxu0 %v851
        %v853 = vpop.f32.mrb[0].mxu0
        %v854 = vadd.f32 %v726, %v853
        %v855 = vpop.f32.mrb[0].mxu0
        %856 = vmatprep.mubr.f32.mxu0 0.0
        %v857 = vand.u32 %v351, 4294901760
        %v858 = vsub.f32 %v351, %v857
        %v859 = vand.u32 %v858, 4294901760
        %860 = vmatmul.mubr.f32.gmra.mrb[0].mxu0 %v859
        %v861 = vpop.f32.mrb[0].mxu0
        %v862 = vadd.f32 %v733, %v861
        %v863 = vpop.f32.mrb[0].mxu0
        %864 = vmatprep.mubr.f32.mxu0 0.0
        %v865 = vand.u32 %v354, 4294901760
        %v866 = vsub.f32 %v354, %v865
        %v867 = vand.u32 %v866, 4294901760
        %868 = vmatmul.mubr.f32.gmra.mrb[0].mxu0 %v867
        %v869 = vpop.f32.mrb[0].mxu0
        %v870 = vadd.f32 %v740, %v869
        %v871 = vpop.f32.mrb[0].mxu0
        %872 = vdwg.mxu0
        %873 = vmatprep.subr.mxu0 0.0
        %v874 = vand.u32 %v274, 4294901760
        %v875 = vsub.f32 %v274, %v874
        %v876 = vand.u32 %v875, 4294901760
        %877 = vmatpush1.msra.mxu0 %v876
        %878 = vmatprep.subr.mxu0 0.0
        %879 = vmatpush1.msra.mxu0 0.0
        %880 = vmatprep.subr.mxu0 0.0
        %881 = vmatpush1.msra.mxu0 0.0
        %882 = vmatprep.subr.mxu0 0.0
        %883 = vmatpush1.msra.mxu0 0.0
        %884 = vmatprep.subr.mxu0 0.0
        %885 = vmatpush1.msra.mxu0 0.0
        %886 = vmatprep.subr.mxu0 0.0
        %887 = vmatpush1.msra.mxu0 0.0
        %888 = vmatprep.subr.mxu0 0.0
        %889 = vmatpush1.msra.mxu0 0.0
        %890 = vmatprep.subr.mxu0 0.0
        %891 = vmatpush1.msra.mxu0 0.0
        %892 = vmatprep.subr.mxu0 0.0
        %893 = vmatpush1.msra.mxu0 0.0
        %894 = vmatprep.subr.mxu0 0.0
        %895 = vmatpush1.msra.mxu0 0.0
        %896 = vmatprep.subr.mxu0 0.0
        %897 = vmatpush1.msra.mxu0 0.0
        %898 = vmatprep.subr.mxu0 0.0
        %899 = vmatpush1.msra.mxu0 0.0
        %900 = vmatprep.subr.mxu0 0.0
        %901 = vmatpush1.msra.mxu0 0.0
        %902 = vmatprep.subr.mxu0 0.0
        %903 = vmatpush1.msra.mxu0 0.0
        %904 = vmatprep.subr.mxu0 0.0
        %905 = vmatpush1.msra.mxu0 0.0
        %906 = vmatprep.subr.mxu0 0.0
        %907 = vmatpush1.msra.mxu0 0.0
        %908 = vmatprep.subr.mxu0 0.0
        %909 = vmatpush1.msra.mxu0 0.0
        %910 = vmatprep.subr.mxu0 0.0
        %911 = vmatpush1.msra.mxu0 0.0
        %912 = vmatprep.subr.mxu0 0.0
        %913 = vmatpush1.msra.mxu0 0.0
        %914 = vmatprep.subr.mxu0 0.0
        %915 = vmatpush1.msra.mxu0 0.0
        %916 = vmatprep.subr.mxu0 0.0
        %917 = vmatpush1.msra.mxu0 0.0
        %918 = vmatprep.subr.mxu0 0.0
        %919 = vmatpush1.msra.mxu0 0.0
        %920 = vmatprep.subr.mxu0 0.0
        %921 = vmatpush1.msra.mxu0 0.0
        %922 = vmatprep.subr.mxu0 0.0
        %923 = vmatpush1.msra.mxu0 0.0
        %924 = vmatprep.subr.mxu0 0.0
        %925 = vmatpush1.msra.mxu0 0.0
        %926 = vmatprep.subr.mxu0 0.0
        %927 = vmatpush1.msra.mxu0 0.0
        %928 = vmatprep.subr.mxu0 0.0
        %929 = vmatpush1.msra.mxu0 0.0
        %930 = vmatprep.subr.mxu0 0.0
        %931 = vmatpush1.msra.mxu0 0.0
        %932 = vmatprep.subr.mxu0 0.0
        %933 = vmatpush1.msra.mxu0 0.0
        %934 = vmatprep.subr.mxu0 0.0
        %935 = vmatpush1.msra.mxu0 0.0
        %936 = vmatprep.subr.mxu0 0.0
        %937 = vmatpush1.msra.mxu0 0.0
        %938 = vmatprep.subr.mxu0 0.0
        %939 = vmatpush1.msra.mxu0 0.0
        %940 = vmatprep.mubr.f32.mxu0 0.0
        %v941 = vand.u32 %v333, 4294901760
        %942 = vmatmul.mubr.f32.gmra.mrb[0].mxu0 %v941
        %v943 = vpop.f32.mrb[0].mxu0
        %v944 = vadd.f32 %v814, %v943
        %v945 = vpop.f32.mrb[0].mxu0
        %946 = vmatprep.mubr.f32.mxu0 0.0
        %v947 = vand.u32 %v336, 4294901760
        %948 = vmatmul.mubr.f32.gmra.mrb[0].mxu0 %v947
        %v949 = vpop.f32.mrb[0].mxu0
        %v950 = vadd.f32 %v822, %v949
        %v951 = vpop.f32.mrb[0].mxu0
        %952 = vmatprep.mubr.f32.mxu0 0.0
        %v953 = vand.u32 %v339, 4294901760
        %954 = vmatmul.mubr.f32.gmra.mrb[0].mxu0 %v953
        %v955 = vpop.f32.mrb[0].mxu0
        %v956 = vadd.f32 %v830, %v955
        %v957 = vpop.f32.mrb[0].mxu0
        %958 = vmatprep.mubr.f32.mxu0 0.0
        %v959 = vand.u32 %v342, 4294901760
        %960 = vmatmul.mubr.f32.gmra.mrb[0].mxu0 %v959
        %v961 = vpop.f32.mrb[0].mxu0
        %v962 = vadd.f32 %v838, %v961
        %v963 = vpop.f32.mrb[0].mxu0
        %964 = vmatprep.mubr.f32.mxu0 0.0
        %v965 = vand.u32 %v345, 4294901760
        %966 = vmatmul.mubr.f32.gmra.mrb[0].mxu0 %v965
        %v967 = vpop.f32.mrb[0].mxu0
        %v968 = vadd.f32 %v846, %v967
        %v969 = vpop.f32.mrb[0].mxu0
        %970 = vmatprep.mubr.f32.mxu0 0.0
        %v971 = vand.u32 %v348, 4294901760
        %972 = vmatmul.mubr.f32.gmra.mrb[0].mxu0 %v971
        %v973 = vpop.f32.mrb[0].mxu0
        %v974 = vadd.f32 %v854, %v973
        %v975 = vpop.f32.mrb[0].mxu0
        %976 = vmatprep.mubr.f32.mxu0 0.0
        %v977 = vand.u32 %v351, 4294901760
        %978 = vmatmul.mubr.f32.gmra.mrb[0].mxu0 %v977
        %v979 = vpop.f32.mrb[0].mxu0
        %v980 = vadd.f32 %v862, %v979
        %v981 = vpop.f32.mrb[0].mxu0
        %982 = vmatprep.mubr.f32.mxu0 0.0
        %v983 = vand.u32 %v354, 4294901760
        %984 = vmatmul.mubr.f32.gmra.mrb[0].mxu0 %v983
        %v985 = vpop.f32.mrb[0].mxu0
        %v986 = vadd.f32 %v870, %v985
        %v987 = vpop.f32.mrb[0].mxu0
        %988 = vdwg.mxu0
        %989 = vmatprep.subr.mxu0 0.0
        %v990 = vand.u32 %v274, 4294901760
        %991 = vmatpush1.msra.mxu0 %v990
        %992 = vmatprep.subr.mxu0 0.0
        %993 = vmatpush1.msra.mxu0 0.0
        %994 = vmatprep.subr.mxu0 0.0
        %995 = vmatpush1.msra.mxu0 0.0
        %996 = vmatprep.subr.mxu0 0.0
        %997 = vmatpush1.msra.mxu0 0.0
        %998 = vmatprep.subr.mxu0 0.0
        %999 = vmatpush1.msra.mxu0 0.0
        %1000 = vmatprep.subr.mxu0 0.0
        %1001 = vmatpush1.msra.mxu0 0.0
        %1002 = vmatprep.subr.mxu0 0.0
        %1003 = vmatpush1.msra.mxu0 0.0
        %1004 = vmatprep.subr.mxu0 0.0
        %1005 = vmatpush1.msra.mxu0 0.0
        %1006 = vmatprep.subr.mxu0 0.0
        %1007 = vmatpush1.msra.mxu0 0.0
        %1008 = vmatprep.subr.mxu0 0.0
        %1009 = vmatpush1.msra.mxu0 0.0
        %1010 = vmatprep.subr.mxu0 0.0
        %1011 = vmatpush1.msra.mxu0 0.0
        %1012 = vmatprep.subr.mxu0 0.0
        %1013 = vmatpush1.msra.mxu0 0.0
        %1014 = vmatprep.subr.mxu0 0.0
        %1015 = vmatpush1.msra.mxu0 0.0
        %1016 = vmatprep.subr.mxu0 0.0
        %1017 = vmatpush1.msra.mxu0 0.0
        %1018 = vmatprep.subr.mxu0 0.0
        %1019 = vmatpush1.msra.mxu0 0.0
        %1020 = vmatprep.subr.mxu0 0.0
        %1021 = vmatpush1.msra.mxu0 0.0
        %1022 = vmatprep.subr.mxu0 0.0
        %1023 = vmatpush1.msra.mxu0 0.0
        %1024 = vmatprep.subr.mxu0 0.0
        %1025 = vmatpush1.msra.mxu0 0.0
        %1026 = vmatprep.subr.mxu0 0.0
        %1027 = vmatpush1.msra.mxu0 0.0
        %1028 = vmatprep.subr.mxu0 0.0
        %1029 = vmatpush1.msra.mxu0 0.0
        %1030 = vmatprep.subr.mxu0 0.0
        %1031 = vmatpush1.msra.mxu0 0.0
        %1032 = vmatprep.subr.mxu0 0.0
        %1033 = vmatpush1.msra.mxu0 0.0
        %1034 = vmatprep.subr.mxu0 0.0
        %1035 = vmatpush1.msra.mxu0 0.0
        %1036 = vmatprep.subr.mxu0 0.0
        %1037 = vmatpush1.msra.mxu0 0.0
        %1038 = vmatprep.subr.mxu0 0.0
        %1039 = vmatpush1.msra.mxu0 0.0
        %1040 = vmatprep.subr.mxu0 0.0
        %1041 = vmatpush1.msra.mxu0 0.0
        %1042 = vmatprep.subr.mxu0 0.0
        %1043 = vmatpush1.msra.mxu0 0.0
        %1044 = vmatprep.subr.mxu0 0.0
        %1045 = vmatpush1.msra.mxu0 0.0
        %1046 = vmatprep.subr.mxu0 0.0
        %1047 = vmatpush1.msra.mxu0 0.0
        %1048 = vmatprep.subr.mxu0 0.0
        %1049 = vmatpush1.msra.mxu0 0.0
        %1050 = vmatprep.subr.mxu0 0.0
        %1051 = vmatpush1.msra.mxu0 0.0
        %1052 = vmatprep.subr.mxu0 0.0
        %1053 = vmatpush1.msra.mxu0 0.0
        %1054 = vmatprep.mubr.f32.mxu0 0.0
        %v1055 = vand.u32 %v333, 4294901760
        %1056 = vmatmul.mubr.f32.gmra.mrb[0].mxu0 %v1055
        %v1057 = vpop.f32.mrb[0].mxu0
        %v1058 = vadd.f32 %v944, %v1057
        %v1059 = vpop.f32.mrb[0].mxu0
        %1060 = vmatprep.mubr.f32.mxu0 0.0
        %v1061 = vand.u32 %v336, 4294901760
        %1062 = vmatmul.mubr.f32.gmra.mrb[0].mxu0 %v1061
        %v1063 = vpop.f32.mrb[0].mxu0
        %v1064 = vadd.f32 %v950, %v1063
        %v1065 = vpop.f32.mrb[0].mxu0
        %1066 = vmatprep.mubr.f32.mxu0 0.0
        %v1067 = vand.u32 %v339, 4294901760
        %1068 = vmatmul.mubr.f32.gmra.mrb[0].mxu0 %v1067
        %v1069 = vpop.f32.mrb[0].mxu0
        %v1070 = vadd.f32 %v956, %v1069
        %v1071 = vpop.f32.mrb[0].mxu0
        %1072 = vmatprep.mubr.f32.mxu0 0.0
        %v1073 = vand.u32 %v342, 4294901760
        %1074 = vmatmul.mubr.f32.gmra.mrb[0].mxu0 %v1073
        %v1075 = vpop.f32.mrb[0].mxu0
        %v1076 = vadd.f32 %v962, %v1075
        %v1077 = vpop.f32.mrb[0].mxu0
        %1078 = vmatprep.mubr.f32.mxu0 0.0
        %v1079 = vand.u32 %v345, 4294901760
        %1080 = vmatmul.mubr.f32.gmra.mrb[0].mxu0 %v1079
        %v1081 = vpop.f32.mrb[0].mxu0
        %v1082 = vadd.f32 %v968, %v1081
        %v1083 = vpop.f32.mrb[0].mxu0
        %1084 = vmatprep.mubr.f32.mxu0 0.0
        %v1085 = vand.u32 %v348, 4294901760
        %1086 = vmatmul.mubr.f32.gmra.mrb[0].mxu0 %v1085
        %v1087 = vpop.f32.mrb[0].mxu0
        %v1088 = vadd.f32 %v974, %v1087
        %v1089 = vpop.f32.mrb[0].mxu0
        %1090 = vmatprep.mubr.f32.mxu0 0.0
        %v1091 = vand.u32 %v351, 4294901760
        %1092 = vmatmul.mubr.f32.gmra.mrb[0].mxu0 %v1091
        %v1093 = vpop.f32.mrb[0].mxu0
        %v1094 = vadd.f32 %v980, %v1093
        %v1095 = vpop.f32.mrb[0].mxu0
        %1096 = vmatprep.mubr.f32.mxu0 0.0
        %v1097 = vand.u32 %v354, 4294901760
        %1098 = vmatmul.mubr.f32.gmra.mrb[0].mxu0 %v1097
        %v1099 = vpop.f32.mrb[0].mxu0
        %v1100 = vadd.f32 %v986, %v1099
        %v1101 = vpop.f32.mrb[0].mxu0
        %1102 = vdwg.mxu0
        %v1103 = vmax.f32 %v1058, 0.0
        %v1104 = vmax.f32 %v1064, 0.0
        %v1105 = vmax.f32 %v1070, 0.0
        %v1106 = vmax.f32 %v1076, 0.0
        %v1107 = vmax.f32 %v1082, 0.0
        %v1108 = vmax.f32 %v1088, 0.0
        %v1109 = vmax.f32 %v1094, 0.0
        %v1110 = vmax.f32 %v1100, 0.0
        %v1111 = vld [vmem:[%s3] sm:$0xff]
        %v1112 = vld [vmem:[%s3 + $0x8] sm:$0xff]
        %v1113 = vld [vmem:[%s4] sm:$0xff]
        %v1114 = vld [vmem:[%s4 + $0x8] sm:$0xff]
        %1116 = vset.pattern.permute.xlu0 0
        %1117 = vperm.xlu0 %1116, %v1113
        %v1118 = vpop.permute.xlu0 %1117
        %1121 = vset.pattern.permute.xlu0 0
        %1122 = vperm.xlu0 %1121, %v1114
        %v1123 = vpop.permute.xlu0 %1122
        %vm1125 = vcmask 523264
        %v1127 = vsel %vm1125, %v1111, 0
        %v1130 = vsel %vm1125, %v1112, 0
        %1132 = vmatprep.subr.mxu0 0.0
        %v1133 = vand.u32 %v1103, 4294901760
        %1134 = vmatpush1.msra.mxu0 %v1133
        %1135 = vmatprep.subr.mxu0 0.0
        %v1136 = vand.u32 %v1104, 4294901760
        %1137 = vmatpush1.msra.mxu0 %v1136
        %1138 = vmatprep.subr.mxu0 0.0
        %v1139 = vand.u32 %v1105, 4294901760
        %1140 = vmatpush1.msra.mxu0 %v1139
        %1141 = vmatprep.subr.mxu0 0.0
        %v1142 = vand.u32 %v1106, 4294901760
        %1143 = vmatpush1.msra.mxu0 %v1142
        %1144 = vmatprep.subr.mxu0 0.0
        %v1145 = vand.u32 %v1107, 4294901760
        %1146 = vmatpush1.msra.mxu0 %v1145
        %1147 = vmatprep.subr.mxu0 0.0
        %v1148 = vand.u32 %v1108, 4294901760
        %1149 = vmatpush1.msra.mxu0 %v1148
        %1150 = vmatprep.subr.mxu0 0.0
        %v1151 = vand.u32 %v1109, 4294901760
        %1152 = vmatpush1.msra.mxu0 %v1151
        %1153 = vmatprep.subr.mxu0 0.0
        %v1154 = vand.u32 %v1110, 4294901760
        %1155 = vmatpush1.msra.mxu0 %v1154
        %1156 = vmatprep.subr.mxu0 0.0
        %1157 = vmatpush1.msra.mxu0 0.0
        %1158 = vmatprep.subr.mxu0 0.0
        %1159 = vmatpush1.msra.mxu0 0.0
        %1160 = vmatprep.subr.mxu0 0.0
        %1161 = vmatpush1.msra.mxu0 0.0
        %1162 = vmatprep.subr.mxu0 0.0
        %1163 = vmatpush1.msra.mxu0 0.0
        %1164 = vmatprep.subr.mxu0 0.0
        %1165 = vmatpush1.msra.mxu0 0.0
        %1166 = vmatprep.subr.mxu0 0.0
        %1167 = vmatpush1.msra.mxu0 0.0
        %1168 = vmatprep.subr.mxu0 0.0
        %1169 = vmatpush1.msra.mxu0 0.0
        %1170 = vmatprep.subr.mxu0 0.0
        %1171 = vmatpush1.msra.mxu0 0.0
        %1172 = vmatprep.subr.mxu0 0.0
        %1173 = vmatpush1.msra.mxu0 0.0
        %1174 = vmatprep.subr.mxu0 0.0
        %1175 = vmatpush1.msra.mxu0 0.0
        %1176 = vmatprep.subr.mxu0 0.0
        %1177 = vmatpush1.msra.mxu0 0.0
        %1178 = vmatprep.subr.mxu0 0.0
        %1179 = vmatpush1.msra.mxu0 0.0
        %1180 = vmatprep.subr.mxu0 0.0
        %1181 = vmatpush1.msra.mxu0 0.0
        %1182 = vmatprep.subr.mxu0 0.0
        %1183 = vmatpush1.msra.mxu0 0.0
        %1184 = vmatprep.subr.mxu0 0.0
        %1185 = vmatpush1.msra.mxu0 0.0
        %1186 = vmatprep.subr.mxu0 0.0
        %1187 = vmatpush1.msra.mxu0 0.0
        %1188 = vmatprep.subr.mxu0 0.0
        %1189 = vmatpush1.msra.mxu0 0.0
        %1190 = vmatprep.subr.mxu0 0.0
        %1191 = vmatpush1.msra.mxu0 0.0
        %1192 = vmatprep.subr.mxu0 0.0
        %1193 = vmatpush1.msra.mxu0 0.0
        %1194 = vmatprep.subr.mxu0 0.0
        %1195 = vmatpush1.msra.mxu0 0.0
        %1196 = vmatprep.subr.mxu0 0.0
        %1197 = vmatpush1.msra.mxu0 0.0
        %1198 = vmatprep.subr.mxu0 0.0
        %1199 = vmatpush1.msra.mxu0 0.0
        %1200 = vmatprep.subr.mxu0 0.0
        %1201 = vmatpush1.msra.mxu0 0.0
        %1202 = vmatprep.subr.mxu0 0.0
        %1203 = vmatpush1.msra.mxu0 0.0
        %1204 = vmatprep.mubr.f32.mxu0 0.0
        %v1205 = vand.u32 %v1127, 4294901760
        %v1206 = vsub.f32 %v1127, %v1205
        %v1207 = vand.u32 %v1206, 4294901760
        %v1208 = vsub.f32 %v1206, %v1207
        %v1209 = vand.u32 %v1208, 4294901760
        %1210 = vmatmul.mubr.f32.gmra.mrb[0].mxu0 %v1209
        %v1211 = vpop.f32.mrb[0].mxu0
        %v1212 = vadd.f32 %v1118, %v1211
        %v1213 = vpop.f32.mrb[0].mxu0
        %1214 = vmatprep.mubr.f32.mxu0 0.0
        %v1215 = vand.u32 %v1130, 4294901760
        %v1216 = vsub.f32 %v1130, %v1215
        %v1217 = vand.u32 %v1216, 4294901760
        %v1218 = vsub.f32 %v1216, %v1217
        %v1219 = vand.u32 %v1218, 4294901760
        %1220 = vmatmul.mubr.f32.gmra.mrb[0].mxu0 %v1219
        %v1221 = vpop.f32.mrb[0].mxu0
        %v1222 = vadd.f32 %v1123, %v1221
        %v1223 = vpop.f32.mrb[0].mxu0
        %1224 = vdwg.mxu0
        %1225 = vmatprep.subr.mxu0 0.0
        %v1226 = vand.u32 %v1103, 4294901760
        %v1227 = vsub.f32 %v1103, %v1226
        %v1228 = vand.u32 %v1227, 4294901760
        %v1229 = vsub.f32 %v1227, %v1228
        %v1230 = vand.u32 %v1229, 4294901760
        %1231 = vmatpush1.msra.mxu0 %v1230
        %1232 = vmatprep.subr.mxu0 0.0
        %v1233 = vand.u32 %v1104, 4294901760
        %v1234 = vsub.f32 %v1104, %v1233
        %v1235 = vand.u32 %v1234, 4294901760
        %v1236 = vsub.f32 %v1234, %v1235
        %v1237 = vand.u32 %v1236, 4294901760
        %1238 = vmatpush1.msra.mxu0 %v1237
        %1239 = vmatprep.subr.mxu0 0.0
        %v1240 = vand.u32 %v1105, 4294901760
        %v1241 = vsub.f32 %v1105, %v1240
        %v1242 = vand.u32 %v1241, 4294901760
        %v1243 = vsub.f32 %v1241, %v1242
        %v1244 = vand.u32 %v1243, 4294901760
        %1245 = vmatpush1.msra.mxu0 %v1244
        %1246 = vmatprep.subr.mxu0 0.0
        %v1247 = vand.u32 %v1106, 4294901760
        %v1248 = vsub.f32 %v1106, %v1247
        %v1249 = vand.u32 %v1248, 4294901760
        %v1250 = vsub.f32 %v1248, %v1249
        %v1251 = vand.u32 %v1250, 4294901760
        %1252 = vmatpush1.msra.mxu0 %v1251
        %1253 = vmatprep.subr.mxu0 0.0
        %v1254 = vand.u32 %v1107, 4294901760
        %v1255 = vsub.f32 %v1107, %v1254
        %v1256 = vand.u32 %v1255, 4294901760
        %v1257 = vsub.f32 %v1255, %v1256
        %v1258 = vand.u32 %v1257, 4294901760
        %1259 = vmatpush1.msra.mxu0 %v1258
        %1260 = vmatprep.subr.mxu0 0.0
        %v1261 = vand.u32 %v1108, 4294901760
        %v1262 = vsub.f32 %v1108, %v1261
        %v1263 = vand.u32 %v1262, 4294901760
        %v1264 = vsub.f32 %v1262, %v1263
        %v1265 = vand.u32 %v1264, 4294901760
        %1266 = vmatpush1.msra.mxu0 %v1265
        %1267 = vmatprep.subr.mxu0 0.0
        %v1268 = vand.u32 %v1109, 4294901760
        %v1269 = vsub.f32 %v1109, %v1268
        %v1270 = vand.u32 %v1269, 4294901760
        %v1271 = vsub.f32 %v1269, %v1270
        %v1272 = vand.u32 %v1271, 4294901760
        %1273 = vmatpush1.msra.mxu0 %v1272
        %1274 = vmatprep.subr.mxu0 0.0
        %v1275 = vand.u32 %v1110, 4294901760
        %v1276 = vsub.f32 %v1110, %v1275
        %v1277 = vand.u32 %v1276, 4294901760
        %v1278 = vsub.f32 %v1276, %v1277
        %v1279 = vand.u32 %v1278, 4294901760
        %1280 = vmatpush1.msra.mxu0 %v1279
        %1281 = vmatprep.subr.mxu0 0.0
        %1282 = vmatpush1.msra.mxu0 0.0
        %1283 = vmatprep.subr.mxu0 0.0
        %1284 = vmatpush1.msra.mxu0 0.0
        %1285 = vmatprep.subr.mxu0 0.0
        %1286 = vmatpush1.msra.mxu0 0.0
        %1287 = vmatprep.subr.mxu0 0.0
        %1288 = vmatpush1.msra.mxu0 0.0
        %1289 = vmatprep.subr.mxu0 0.0
        %1290 = vmatpush1.msra.mxu0 0.0
        %1291 = vmatprep.subr.mxu0 0.0
        %1292 = vmatpush1.msra.mxu0 0.0
        %1293 = vmatprep.subr.mxu0 0.0
        %1294 = vmatpush1.msra.mxu0 0.0
        %1295 = vmatprep.subr.mxu0 0.0
        %1296 = vmatpush1.msra.mxu0 0.0
        %1297 = vmatprep.subr.mxu0 0.0
        %1298 = vmatpush1.msra.mxu0 0.0
        %1299 = vmatprep.subr.mxu0 0.0
        %1300 = vmatpush1.msra.mxu0 0.0
        %1301 = vmatprep.subr.mxu0 0.0
        %1302 = vmatpush1.msra.mxu0 0.0
        %1303 = vmatprep.subr.mxu0 0.0
        %1304 = vmatpush1.msra.mxu0 0.0
        %1305 = vmatprep.subr.mxu0 0.0
        %1306 = vmatpush1.msra.mxu0 0.0
        %1307 = vmatprep.subr.mxu0 0.0
        %1308 = vmatpush1.msra.mxu0 0.0
        %1309 = vmatprep.subr.mxu0 0.0
        %1310 = vmatpush1.msra.mxu0 0.0
        %1311 = vmatprep.subr.mxu0 0.0
        %1312 = vmatpush1.msra.mxu0 0.0
        %1313 = vmatprep.subr.mxu0 0.0
        %1314 = vmatpush1.msra.mxu0 0.0
        %1315 = vmatprep.subr.mxu0 0.0
        %1316 = vmatpush1.msra.mxu0 0.0
        %1317 = vmatprep.subr.mxu0 0.0
        %1318 = vmatpush1.msra.mxu0 0.0
        %1319 = vmatprep.subr.mxu0 0.0
        %1320 = vmatpush1.msra.mxu0 0.0
        %1321 = vmatprep.subr.mxu0 0.0
        %1322 = vmatpush1.msra.mxu0 0.0
        %1323 = vmatprep.subr.mxu0 0.0
        %1324 = vmatpush1.msra.mxu0 0.0
        %1325 = vmatprep.subr.mxu0 0.0
        %1326 = vmatpush1.msra.mxu0 0.0
        %1327 = vmatprep.subr.mxu0 0.0
        %1328 = vmatpush1.msra.mxu0 0.0
        %1329 = vmatprep.mubr.f32.mxu0 0.0
        %v1330 = vand.u32 %v1127, 4294901760
        %1331 = vmatmul.mubr.f32.gmra.mrb[0].mxu0 %v1330
        %v1332 = vpop.f32.mrb[0].mxu0
        %v1333 = vadd.f32 %v1212, %v1332
        %v1334 = vpop.f32.mrb[0].mxu0
        %1335 = vmatprep.mubr.f32.mxu0 0.0
        %v1336 = vand.u32 %v1130, 4294901760
        %1337 = vmatmul.mubr.f32.gmra.mrb[0].mxu0 %v1336
        %v1338 = vpop.f32.mrb[0].mxu0
        %v1339 = vadd.f32 %v1222, %v1338
        %v1340 = vpop.f32.mrb[0].mxu0
        %1341 = vdwg.mxu0
        %1342 = vmatprep.subr.mxu0 0.0
        %v1343 = vand.u32 %v1103, 4294901760
        %v1344 = vsub.f32 %v1103, %v1343
        %1345 = vmatpush1.msra.mxu0 %v1344
        %1346 = vmatprep.subr.mxu0 0.0
        %v1347 = vand.u32 %v1104, 4294901760
        %v1348 = vsub.f32 %v1104, %v1347
        %1349 = vmatpush1.msra.mxu0 %v1348
        %1350 = vmatprep.subr.mxu0 0.0
        %v1351 = vand.u32 %v1105, 4294901760
        %v1352 = vsub.f32 %v1105, %v1351
        %1353 = vmatpush1.msra.mxu0 %v1352
        %1354 = vmatprep.subr.mxu0 0.0
        %v1355 = vand.u32 %v1106, 4294901760
        %v1356 = vsub.f32 %v1106, %v1355
        %1357 = vmatpush1.msra.mxu0 %v1356
        %1358 = vmatprep.subr.mxu0 0.0
        %v1359 = vand.u32 %v1107, 4294901760
        %v1360 = vsub.f32 %v1107, %v1359
        %1361 = vmatpush1.msra.mxu0 %v1360
        %1362 = vmatprep.subr.mxu0 0.0
        %v1363 = vand.u32 %v1108, 4294901760
        %v1364 = vsub.f32 %v1108, %v1363
        %1365 = vmatpush1.msra.mxu0 %v1364
        %1366 = vmatprep.subr.mxu0 0.0
        %v1367 = vand.u32 %v1109, 4294901760
        %v1368 = vsub.f32 %v1109, %v1367
        %1369 = vmatpush1.msra.mxu0 %v1368
        %1370 = vmatprep.subr.mxu0 0.0
        %v1371 = vand.u32 %v1110, 4294901760
        %v1372 = vsub.f32 %v1110, %v1371
        %1373 = vmatpush1.msra.mxu0 %v1372
        %1374 = vmatprep.subr.mxu0 0.0
        %1375 = vmatpush1.msra.mxu0 0.0
        %1376 = vmatprep.subr.mxu0 0.0
        %1377 = vmatpush1.msra.mxu0 0.0
        %1378 = vmatprep.subr.mxu0 0.0
        %1379 = vmatpush1.msra.mxu0 0.0
        %1380 = vmatprep.subr.mxu0 0.0
        %1381 = vmatpush1.msra.mxu0 0.0
        %1382 = vmatprep.subr.mxu0 0.0
        %1383 = vmatpush1.msra.mxu0 0.0
        %1384 = vmatprep.subr.mxu0 0.0
        %1385 = vmatpush1.msra.mxu0 0.0
        %1386 = vmatprep.subr.mxu0 0.0
        %1387 = vmatpush1.msra.mxu0 0.0
        %1388 = vmatprep.subr.mxu0 0.0
        %1389 = vmatpush1.msra.mxu0 0.0
        %1390 = vmatprep.subr.mxu0 0.0
        %1391 = vmatpush1.msra.mxu0 0.0
        %1392 = vmatprep.subr.mxu0 0.0
        %1393 = vmatpush1.msra.mxu0 0.0
        %1394 = vmatprep.subr.mxu0 0.0
        %1395 = vmatpush1.msra.mxu0 0.0
        %1396 = vmatprep.subr.mxu0 0.0
        %1397 = vmatpush1.msra.mxu0 0.0
        %1398 = vmatprep.subr.mxu0 0.0
        %1399 = vmatpush1.msra.mxu0 0.0
        %1400 = vmatprep.subr.mxu0 0.0
        %1401 = vmatpush1.msra.mxu0 0.0
        %1402 = vmatprep.subr.mxu0 0.0
        %1403 = vmatpush1.msra.mxu0 0.0
        %1404 = vmatprep.subr.mxu0 0.0
        %1405 = vmatpush1.msra.mxu0 0.0
        %1406 = vmatprep.subr.mxu0 0.0
        %1407 = vmatpush1.msra.mxu0 0.0
        %1408 = vmatprep.subr.mxu0 0.0
        %1409 = vmatpush1.msra.mxu0 0.0
        %1410 = vmatprep.subr.mxu0 0.0
        %1411 = vmatpush1.msra.mxu0 0.0
        %1412 = vmatprep.subr.mxu0 0.0
        %1413 = vmatpush1.msra.mxu0 0.0
        %1414 = vmatprep.subr.mxu0 0.0
        %1415 = vmatpush1.msra.mxu0 0.0
        %1416 = vmatprep.subr.mxu0 0.0
        %1417 = vmatpush1.msra.mxu0 0.0
        %1418 = vmatprep.subr.mxu0 0.0
        %1419 = vmatpush1.msra.mxu0 0.0
        %1420 = vmatprep.subr.mxu0 0.0
        %1421 = vmatpush1.msra.mxu0 0.0
        %1422 = vmatprep.mubr.f32.mxu0 0.0
        %v1423 = vand.u32 %v1127, 4294901760
        %v1424 = vsub.f32 %v1127, %v1423
        %1425 = vmatmul.mubr.f32.gmra.mrb[0].mxu0 %v1424
        %v1426 = vpop.f32.mrb[0].mxu0
        %v1427 = vadd.f32 %v1333, %v1426
        %v1428 = vpop.f32.mrb[0].mxu0
        %1429 = vmatprep.mubr.f32.mxu0 0.0
        %v1430 = vand.u32 %v1130, 4294901760
        %v1431 = vsub.f32 %v1130, %v1430
        %1432 = vmatmul.mubr.f32.gmra.mrb[0].mxu0 %v1431
        %v1433 = vpop.f32.mrb[0].mxu0
        %v1434 = vadd.f32 %v1339, %v1433
        %v1435 = vpop.f32.mrb[0].mxu0
        %1436 = vdwg.mxu0
        %1437 = vmatprep.subr.mxu0 0.0
        %v1438 = vand.u32 %v1103, 4294901760
        %1439 = vmatpush1.msra.mxu0 %v1438
        %1440 = vmatprep.subr.mxu0 0.0
        %v1441 = vand.u32 %v1104, 4294901760
        %1442 = vmatpush1.msra.mxu0 %v1441
        %1443 = vmatprep.subr.mxu0 0.0
        %v1444 = vand.u32 %v1105, 4294901760
        %1445 = vmatpush1.msra.mxu0 %v1444
        %1446 = vmatprep.subr.mxu0 0.0
        %v1447 = vand.u32 %v1106, 4294901760
        %1448 = vmatpush1.msra.mxu0 %v1447
        %1449 = vmatprep.subr.mxu0 0.0
        %v1450 = vand.u32 %v1107, 4294901760
        %1451 = vmatpush1.msra.mxu0 %v1450
        %1452 = vmatprep.subr.mxu0 0.0
        %v1453 = vand.u32 %v1108, 4294901760
        %1454 = vmatpush1.msra.mxu0 %v1453
        %1455 = vmatprep.subr.mxu0 0.0
        %v1456 = vand.u32 %v1109, 4294901760
        %1457 = vmatpush1.msra.mxu0 %v1456
        %1458 = vmatprep.subr.mxu0 0.0
        %v1459 = vand.u32 %v1110, 4294901760
        %1460 = vmatpush1.msra.mxu0 %v1459
        %1461 = vmatprep.subr.mxu0 0.0
        %1462 = vmatpush1.msra.mxu0 0.0
        %1463 = vmatprep.subr.mxu0 0.0
        %1464 = vmatpush1.msra.mxu0 0.0
        %1465 = vmatprep.subr.mxu0 0.0
        %1466 = vmatpush1.msra.mxu0 0.0
        %1467 = vmatprep.subr.mxu0 0.0
        %1468 = vmatpush1.msra.mxu0 0.0
        %1469 = vmatprep.subr.mxu0 0.0
        %1470 = vmatpush1.msra.mxu0 0.0
        %1471 = vmatprep.subr.mxu0 0.0
        %1472 = vmatpush1.msra.mxu0 0.0
        %1473 = vmatprep.subr.mxu0 0.0
        %1474 = vmatpush1.msra.mxu0 0.0
        %1475 = vmatprep.subr.mxu0 0.0
        %1476 = vmatpush1.msra.mxu0 0.0
        %1477 = vmatprep.subr.mxu0 0.0
        %1478 = vmatpush1.msra.mxu0 0.0
        %1479 = vmatprep.subr.mxu0 0.0
        %1480 = vmatpush1.msra.mxu0 0.0
        %1481 = vmatprep.subr.mxu0 0.0
        %1482 = vmatpush1.msra.mxu0 0.0
        %1483 = vmatprep.subr.mxu0 0.0
        %1484 = vmatpush1.msra.mxu0 0.0
        %1485 = vmatprep.subr.mxu0 0.0
        %1486 = vmatpush1.msra.mxu0 0.0
        %1487 = vmatprep.subr.mxu0 0.0
        %1488 = vmatpush1.msra.mxu0 0.0
        %1489 = vmatprep.subr.mxu0 0.0
        %1490 = vmatpush1.msra.mxu0 0.0
        %1491 = vmatprep.subr.mxu0 0.0
        %1492 = vmatpush1.msra.mxu0 0.0
        %1493 = vmatprep.subr.mxu0 0.0
        %1494 = vmatpush1.msra.mxu0 0.0
        %1495 = vmatprep.subr.mxu0 0.0
        %1496 = vmatpush1.msra.mxu0 0.0
        %1497 = vmatprep.subr.mxu0 0.0
        %1498 = vmatpush1.msra.mxu0 0.0
        %1499 = vmatprep.subr.mxu0 0.0
        %1500 = vmatpush1.msra.mxu0 0.0
        %1501 = vmatprep.subr.mxu0 0.0
        %1502 = vmatpush1.msra.mxu0 0.0
        %1503 = vmatprep.subr.mxu0 0.0
        %1504 = vmatpush1.msra.mxu0 0.0
        %1505 = vmatprep.subr.mxu0 0.0
        %1506 = vmatpush1.msra.mxu0 0.0
        %1507 = vmatprep.subr.mxu0 0.0
        %1508 = vmatpush1.msra.mxu0 0.0
        %1509 = vmatprep.mubr.f32.mxu0 0.0
        %v1510 = vand.u32 %v1127, 4294901760
        %v1511 = vsub.f32 %v1127, %v1510
        %v1512 = vand.u32 %v1511, 4294901760
        %1513 = vmatmul.mubr.f32.gmra.mrb[0].mxu0 %v1512
        %v1514 = vpop.f32.mrb[0].mxu0
        %v1515 = vadd.f32 %v1427, %v1514
        %v1516 = vpop.f32.mrb[0].mxu0
        %1517 = vmatprep.mubr.f32.mxu0 0.0
        %v1518 = vand.u32 %v1130, 4294901760
        %v1519 = vsub.f32 %v1130, %v1518
        %v1520 = vand.u32 %v1519, 4294901760
        %1521 = vmatmul.mubr.f32.gmra.mrb[0].mxu0 %v1520
        %v1522 = vpop.f32.mrb[0].mxu0
        %v1523 = vadd.f32 %v1434, %v1522
        %v1524 = vpop.f32.mrb[0].mxu0
        %1525 = vdwg.mxu0
        %1526 = vmatprep.subr.mxu0 0.0
        %v1527 = vand.u32 %v1103, 4294901760
        %v1528 = vsub.f32 %v1103, %v1527
        %v1529 = vand.u32 %v1528, 4294901760
        %1530 = vmatpush1.msra.mxu0 %v1529
        %1531 = vmatprep.subr.mxu0 0.0
        %v1532 = vand.u32 %v1104, 4294901760
        %v1533 = vsub.f32 %v1104, %v1532
        %v1534 = vand.u32 %v1533, 4294901760
        %1535 = vmatpush1.msra.mxu0 %v1534
        %1536 = vmatprep.subr.mxu0 0.0
        %v1537 = vand.u32 %v1105, 4294901760
        %v1538 = vsub.f32 %v1105, %v1537
        %v1539 = vand.u32 %v1538, 4294901760
        %1540 = vmatpush1.msra.mxu0 %v1539
        %1541 = vmatprep.subr.mxu0 0.0
        %v1542 = vand.u32 %v1106, 4294901760
        %v1543 = vsub.f32 %v1106, %v1542
        %v1544 = vand.u32 %v1543, 4294901760
        %1545 = vmatpush1.msra.mxu0 %v1544
        %1546 = vmatprep.subr.mxu0 0.0
        %v1547 = vand.u32 %v1107, 4294901760
        %v1548 = vsub.f32 %v1107, %v1547
        %v1549 = vand.u32 %v1548, 4294901760
        %1550 = vmatpush1.msra.mxu0 %v1549
        %1551 = vmatprep.subr.mxu0 0.0
        %v1552 = vand.u32 %v1108, 4294901760
        %v1553 = vsub.f32 %v1108, %v1552
        %v1554 = vand.u32 %v1553, 4294901760
        %1555 = vmatpush1.msra.mxu0 %v1554
        %1556 = vmatprep.subr.mxu0 0.0
        %v1557 = vand.u32 %v1109, 4294901760
        %v1558 = vsub.f32 %v1109, %v1557
        %v1559 = vand.u32 %v1558, 4294901760
        %1560 = vmatpush1.msra.mxu0 %v1559
        %1561 = vmatprep.subr.mxu0 0.0
        %v1562 = vand.u32 %v1110, 4294901760
        %v1563 = vsub.f32 %v1110, %v1562
        %v1564 = vand.u32 %v1563, 4294901760
        %1565 = vmatpush1.msra.mxu0 %v1564
        %1566 = vmatprep.subr.mxu0 0.0
        %1567 = vmatpush1.msra.mxu0 0.0
        %1568 = vmatprep.subr.mxu0 0.0
        %1569 = vmatpush1.msra.mxu0 0.0
        %1570 = vmatprep.subr.mxu0 0.0
        %1571 = vmatpush1.msra.mxu0 0.0
        %1572 = vmatprep.subr.mxu0 0.0
        %1573 = vmatpush1.msra.mxu0 0.0
        %1574 = vmatprep.subr.mxu0 0.0
        %1575 = vmatpush1.msra.mxu0 0.0
        %1576 = vmatprep.subr.mxu0 0.0
        %1577 = vmatpush1.msra.mxu0 0.0
        %1578 = vmatprep.subr.mxu0 0.0
        %1579 = vmatpush1.msra.mxu0 0.0
        %1580 = vmatprep.subr.mxu0 0.0
        %1581 = vmatpush1.msra.mxu0 0.0
        %1582 = vmatprep.subr.mxu0 0.0
        %1583 = vmatpush1.msra.mxu0 0.0
        %1584 = vmatprep.subr.mxu0 0.0
        %1585 = vmatpush1.msra.mxu0 0.0
        %1586 = vmatprep.subr.mxu0 0.0
        %1587 = vmatpush1.msra.mxu0 0.0
        %1588 = vmatprep.subr.mxu0 0.0
        %1589 = vmatpush1.msra.mxu0 0.0
        %1590 = vmatprep.subr.mxu0 0.0
        %1591 = vmatpush1.msra.mxu0 0.0
        %1592 = vmatprep.subr.mxu0 0.0
        %1593 = vmatpush1.msra.mxu0 0.0
        %1594 = vmatprep.subr.mxu0 0.0
        %1595 = vmatpush1.msra.mxu0 0.0
        %1596 = vmatprep.subr.mxu0 0.0
        %1597 = vmatpush1.msra.mxu0 0.0
        %1598 = vmatprep.subr.mxu0 0.0
        %1599 = vmatpush1.msra.mxu0 0.0
        %1600 = vmatprep.subr.mxu0 0.0
        %1601 = vmatpush1.msra.mxu0 0.0
        %1602 = vmatprep.subr.mxu0 0.0
        %1603 = vmatpush1.msra.mxu0 0.0
        %1604 = vmatprep.subr.mxu0 0.0
        %1605 = vmatpush1.msra.mxu0 0.0
        %1606 = vmatprep.subr.mxu0 0.0
        %1607 = vmatpush1.msra.mxu0 0.0
        %1608 = vmatprep.subr.mxu0 0.0
        %1609 = vmatpush1.msra.mxu0 0.0
        %1610 = vmatprep.subr.mxu0 0.0
        %1611 = vmatpush1.msra.mxu0 0.0
        %1612 = vmatprep.subr.mxu0 0.0
        %1613 = vmatpush1.msra.mxu0 0.0
        %1614 = vmatprep.mubr.f32.mxu0 0.0
        %v1615 = vand.u32 %v1127, 4294901760
        %1616 = vmatmul.mubr.f32.gmra.mrb[0].mxu0 %v1615
        %v1617 = vpop.f32.mrb[0].mxu0
        %v1618 = vadd.f32 %v1515, %v1617
        %v1619 = vpop.f32.mrb[0].mxu0
        %1620 = vmatprep.mubr.f32.mxu0 0.0
        %v1621 = vand.u32 %v1130, 4294901760
        %1622 = vmatmul.mubr.f32.gmra.mrb[0].mxu0 %v1621
        %v1623 = vpop.f32.mrb[0].mxu0
        %v1624 = vadd.f32 %v1523, %v1623
        %v1625 = vpop.f32.mrb[0].mxu0
        %1626 = vdwg.mxu0
        %1627 = vmatprep.subr.mxu0 0.0
        %v1628 = vand.u32 %v1103, 4294901760
        %1629 = vmatpush1.msra.mxu0 %v1628
        %1630 = vmatprep.subr.mxu0 0.0
        %v1631 = vand.u32 %v1104, 4294901760
        %1632 = vmatpush1.msra.mxu0 %v1631
        %1633 = vmatprep.subr.mxu0 0.0
        %v1634 = vand.u32 %v1105, 4294901760
        %1635 = vmatpush1.msra.mxu0 %v1634
        %1636 = vmatprep.subr.mxu0 0.0
        %v1637 = vand.u32 %v1106, 4294901760
        %1638 = vmatpush1.msra.mxu0 %v1637
        %1639 = vmatprep.subr.mxu0 0.0
        %v1640 = vand.u32 %v1107, 4294901760
        %1641 = vmatpush1.msra.mxu0 %v1640
        %1642 = vmatprep.subr.mxu0 0.0
        %v1643 = vand.u32 %v1108, 4294901760
        %1644 = vmatpush1.msra.mxu0 %v1643
        %1645 = vmatprep.subr.mxu0 0.0
        %v1646 = vand.u32 %v1109, 4294901760
        %1647 = vmatpush1.msra.mxu0 %v1646
        %1648 = vmatprep.subr.mxu0 0.0
        %v1649 = vand.u32 %v1110, 4294901760
        %1650 = vmatpush1.msra.mxu0 %v1649
        %1651 = vmatprep.subr.mxu0 0.0
        %1652 = vmatpush1.msra.mxu0 0.0
        %1653 = vmatprep.subr.mxu0 0.0
        %1654 = vmatpush1.msra.mxu0 0.0
        %1655 = vmatprep.subr.mxu0 0.0
        %1656 = vmatpush1.msra.mxu0 0.0
        %1657 = vmatprep.subr.mxu0 0.0
        %1658 = vmatpush1.msra.mxu0 0.0
        %1659 = vmatprep.subr.mxu0 0.0
        %1660 = vmatpush1.msra.mxu0 0.0
        %1661 = vmatprep.subr.mxu0 0.0
        %1662 = vmatpush1.msra.mxu0 0.0
        %1663 = vmatprep.subr.mxu0 0.0
        %1664 = vmatpush1.msra.mxu0 0.0
        %1665 = vmatprep.subr.mxu0 0.0
        %1666 = vmatpush1.msra.mxu0 0.0
        %1667 = vmatprep.subr.mxu0 0.0
        %1668 = vmatpush1.msra.mxu0 0.0
        %1669 = vmatprep.subr.mxu0 0.0
        %1670 = vmatpush1.msra.mxu0 0.0
        %1671 = vmatprep.subr.mxu0 0.0
        %1672 = vmatpush1.msra.mxu0 0.0
        %1673 = vmatprep.subr.mxu0 0.0
        %1674 = vmatpush1.msra.mxu0 0.0
        %1675 = vmatprep.subr.mxu0 0.0
        %1676 = vmatpush1.msra.mxu0 0.0
        %1677 = vmatprep.subr.mxu0 0.0
        %1678 = vmatpush1.msra.mxu0 0.0
        %1679 = vmatprep.subr.mxu0 0.0
        %1680 = vmatpush1.msra.mxu0 0.0
        %1681 = vmatprep.subr.mxu0 0.0
        %1682 = vmatpush1.msra.mxu0 0.0
        %1683 = vmatprep.subr.mxu0 0.0
        %1684 = vmatpush1.msra.mxu0 0.0
        %1685 = vmatprep.subr.mxu0 0.0
        %1686 = vmatpush1.msra.mxu0 0.0
        %1687 = vmatprep.subr.mxu0 0.0
        %1688 = vmatpush1.msra.mxu0 0.0
        %1689 = vmatprep.subr.mxu0 0.0
        %1690 = vmatpush1.msra.mxu0 0.0
        %1691 = vmatprep.subr.mxu0 0.0
        %1692 = vmatpush1.msra.mxu0 0.0
        %1693 = vmatprep.subr.mxu0 0.0
        %1694 = vmatpush1.msra.mxu0 0.0
        %1695 = vmatprep.subr.mxu0 0.0
        %1696 = vmatpush1.msra.mxu0 0.0
        %1697 = vmatprep.subr.mxu0 0.0
        %1698 = vmatpush1.msra.mxu0 0.0
        %1699 = vmatprep.mubr.f32.mxu0 0.0
        %v1700 = vand.u32 %v1127, 4294901760
        %1701 = vmatmul.mubr.f32.gmra.mrb[0].mxu0 %v1700
        %v1702 = vpop.f32.mrb[0].mxu0
        %v1703 = vadd.f32 %v1618, %v1702
        %v1704 = vpop.f32.mrb[0].mxu0
        %1705 = vmatprep.mubr.f32.mxu0 0.0
        %v1706 = vand.u32 %v1130, 4294901760
        %1707 = vmatmul.mubr.f32.gmra.mrb[0].mxu0 %v1706
        %v1708 = vpop.f32.mrb[0].mxu0
        %v1709 = vadd.f32 %v1624, %v1708
        %v1710 = vpop.f32.mrb[0].mxu0
        %1711 = vdwg.mxu0
        %v1712 = vmax.f32 %v1703, 0.0
        %v1713 = vmax.f32 %v1709, 0.0
        %v1714 = vld [vmem:[%s5] sm:$0x3]
        %v1715 = vld [vmem:[%s6] sm:$0x3]
        %1717 = vset.pattern.permute.xlu0 0
        %1718 = vperm.xlu0 %1717, %v1715
        %v1719 = vpop.permute.xlu0 %1718
        %vm1721 = vcmask 130048
        %v1723 = vsel %vm1721, %v1714, 0
        %1725 = vmatprep.subr.mxu0 0.0
        %v1726 = vand.u32 %v1712, 4294901760
        %1727 = vmatpush1.msra.mxu0 %v1726
        %1728 = vmatprep.subr.mxu0 0.0
        %v1729 = vand.u32 %v1713, 4294901760
        %1730 = vmatpush1.msra.mxu0 %v1729
        %1731 = vmatprep.subr.mxu0 0.0
        %1732 = vmatpush1.msra.mxu0 0.0
        %1733 = vmatprep.subr.mxu0 0.0
        %1734 = vmatpush1.msra.mxu0 0.0
        %1735 = vmatprep.subr.mxu0 0.0
        %1736 = vmatpush1.msra.mxu0 0.0
        %1737 = vmatprep.subr.mxu0 0.0
        %1738 = vmatpush1.msra.mxu0 0.0
        %1739 = vmatprep.subr.mxu0 0.0
        %1740 = vmatpush1.msra.mxu0 0.0
        %1741 = vmatprep.subr.mxu0 0.0
        %1742 = vmatpush1.msra.mxu0 0.0
        %1743 = vmatprep.subr.mxu0 0.0
        %1744 = vmatpush1.msra.mxu0 0.0
        %1745 = vmatprep.subr.mxu0 0.0
        %1746 = vmatpush1.msra.mxu0 0.0
        %1747 = vmatprep.subr.mxu0 0.0
        %1748 = vmatpush1.msra.mxu0 0.0
        %1749 = vmatprep.subr.mxu0 0.0
        %1750 = vmatpush1.msra.mxu0 0.0
        %1751 = vmatprep.subr.mxu0 0.0
        %1752 = vmatpush1.msra.mxu0 0.0
        %1753 = vmatprep.subr.mxu0 0.0
        %1754 = vmatpush1.msra.mxu0 0.0
        %1755 = vmatprep.subr.mxu0 0.0
        %1756 = vmatpush1.msra.mxu0 0.0
        %1757 = vmatprep.subr.mxu0 0.0
        %1758 = vmatpush1.msra.mxu0 0.0
        %1759 = vmatprep.subr.mxu0 0.0
        %1760 = vmatpush1.msra.mxu0 0.0
        %1761 = vmatprep.subr.mxu0 0.0
        %1762 = vmatpush1.msra.mxu0 0.0
        %1763 = vmatprep.subr.mxu0 0.0
        %1764 = vmatpush1.msra.mxu0 0.0
        %1765 = vmatprep.subr.mxu0 0.0
        %1766 = vmatpush1.msra.mxu0 0.0
        %1767 = vmatprep.subr.mxu0 0.0
        %1768 = vmatpush1.msra.mxu0 0.0
        %1769 = vmatprep.subr.mxu0 0.0
        %1770 = vmatpush1.msra.mxu0 0.0
        %1771 = vmatprep.subr.mxu0 0.0
        %1772 = vmatpush1.msra.mxu0 0.0
        %1773 = vmatprep.subr.mxu0 0.0
        %1774 = vmatpush1.msra.mxu0 0.0
        %1775 = vmatprep.subr.mxu0 0.0
        %1776 = vmatpush1.msra.mxu0 0.0
        %1777 = vmatprep.subr.mxu0 0.0
        %1778 = vmatpush1.msra.mxu0 0.0
        %1779 = vmatprep.subr.mxu0 0.0
        %1780 = vmatpush1.msra.mxu0 0.0
        %1781 = vmatprep.subr.mxu0 0.0
        %1782 = vmatpush1.msra.mxu0 0.0
        %1783 = vmatprep.subr.mxu0 0.0
        %1784 = vmatpush1.msra.mxu0 0.0
        %1785 = vmatprep.subr.mxu0 0.0
        %1786 = vmatpush1.msra.mxu0 0.0
        %1787 = vmatprep.subr.mxu0 0.0
        %1788 = vmatpush1.msra.mxu0 0.0
        %1789 = vmatprep.subr.mxu0 0.0
        %1790 = vmatpush1.msra.mxu0 0.0
        %1791 = vmatprep.mubr.f32.mxu0 0.0
        %v1792 = vand.u32 %v1723, 4294901760
        %v1793 = vsub.f32 %v1723, %v1792
        %v1794 = vand.u32 %v1793, 4294901760
        %v1795 = vsub.f32 %v1793, %v1794
        %v1796 = vand.u32 %v1795, 4294901760
        %1797 = vmatmul.mubr.f32.gmra.mrb[0].mxu0 %v1796
        %v1798 = vpop.f32.mrb[0].mxu0
        %v1799 = vadd.f32 %v1719, %v1798
        %v1800 = vpop.f32.mrb[0].mxu0
        %1801 = vdwg.mxu0
        %1802 = vmatprep.subr.mxu0 0.0
        %v1803 = vand.u32 %v1712, 4294901760
        %v1804 = vsub.f32 %v1712, %v1803
        %v1805 = vand.u32 %v1804, 4294901760
        %v1806 = vsub.f32 %v1804, %v1805
        %v1807 = vand.u32 %v1806, 4294901760
        %1808 = vmatpush1.msra.mxu0 %v1807
        %1809 = vmatprep.subr.mxu0 0.0
        %v1810 = vand.u32 %v1713, 4294901760
        %v1811 = vsub.f32 %v1713, %v1810
        %v1812 = vand.u32 %v1811, 4294901760
        %v1813 = vsub.f32 %v1811, %v1812
        %v1814 = vand.u32 %v1813, 4294901760
        %1815 = vmatpush1.msra.mxu0 %v1814
        %1816 = vmatprep.subr.mxu0 0.0
        %1817 = vmatpush1.msra.mxu0 0.0
        %1818 = vmatprep.subr.mxu0 0.0
        %1819 = vmatpush1.msra.mxu0 0.0
        %1820 = vmatprep.subr.mxu0 0.0
        %1821 = vmatpush1.msra.mxu0 0.0
        %1822 = vmatprep.subr.mxu0 0.0
        %1823 = vmatpush1.msra.mxu0 0.0
        %1824 = vmatprep.subr.mxu0 0.0
        %1825 = vmatpush1.msra.mxu0 0.0
        %1826 = vmatprep.subr.mxu0 0.0
        %1827 = vmatpush1.msra.mxu0 0.0
        %1828 = vmatprep.subr.mxu0 0.0
        %1829 = vmatpush1.msra.mxu0 0.0
        %1830 = vmatprep.subr.mxu0 0.0
        %1831 = vmatpush1.msra.mxu0 0.0
        %1832 = vmatprep.subr.mxu0 0.0
        %1833 = vmatpush1.msra.mxu0 0.0
        %1834 = vmatprep.subr.mxu0 0.0
        %1835 = vmatpush1.msra.mxu0 0.0
        %1836 = vmatprep.subr.mxu0 0.0
        %1837 = vmatpush1.msra.mxu0 0.0
        %1838 = vmatprep.subr.mxu0 0.0
        %1839 = vmatpush1.msra.mxu0 0.0
        %1840 = vmatprep.subr.mxu0 0.0
        %1841 = vmatpush1.msra.mxu0 0.0
        %1842 = vmatprep.subr.mxu0 0.0
        %1843 = vmatpush1.msra.mxu0 0.0
        %1844 = vmatprep.subr.mxu0 0.0
        %1845 = vmatpush1.msra.mxu0 0.0
        %1846 = vmatprep.subr.mxu0 0.0
        %1847 = vmatpush1.msra.mxu0 0.0
        %1848 = vmatprep.subr.mxu0 0.0
        %1849 = vmatpush1.msra.mxu0 0.0
        %1850 = vmatprep.subr.mxu0 0.0
        %1851 = vmatpush1.msra.mxu0 0.0
        %1852 = vmatprep.subr.mxu0 0.0
        %1853 = vmatpush1.msra.mxu0 0.0
        %1854 = vmatprep.subr.mxu0 0.0
        %1855 = vmatpush1.msra.mxu0 0.0
        %1856 = vmatprep.subr.mxu0 0.0
        %1857 = vmatpush1.msra.mxu0 0.0
        %1858 = vmatprep.subr.mxu0 0.0
        %1859 = vmatpush1.msra.mxu0 0.0
        %1860 = vmatprep.subr.mxu0 0.0
        %1861 = vmatpush1.msra.mxu0 0.0
        %1862 = vmatprep.subr.mxu0 0.0
        %1863 = vmatpush1.msra.mxu0 0.0
        %1864 = vmatprep.subr.mxu0 0.0
        %1865 = vmatpush1.msra.mxu0 0.0
        %1866 = vmatprep.subr.mxu0 0.0
        %1867 = vmatpush1.msra.mxu0 0.0
        %1868 = vmatprep.subr.mxu0 0.0
        %1869 = vmatpush1.msra.mxu0 0.0
        %1870 = vmatprep.subr.mxu0 0.0
        %1871 = vmatpush1.msra.mxu0 0.0
        %1872 = vmatprep.subr.mxu0 0.0
        %1873 = vmatpush1.msra.mxu0 0.0
        %1874 = vmatprep.subr.mxu0 0.0
        %1875 = vmatpush1.msra.mxu0 0.0
        %1876 = vmatprep.mubr.f32.mxu0 0.0
        %v1877 = vand.u32 %v1723, 4294901760
        %1878 = vmatmul.mubr.f32.gmra.mrb[0].mxu0 %v1877
        %v1879 = vpop.f32.mrb[0].mxu0
        %v1880 = vadd.f32 %v1799, %v1879
        %v1881 = vpop.f32.mrb[0].mxu0
        %1882 = vdwg.mxu0
        %1883 = vmatprep.subr.mxu0 0.0
        %v1884 = vand.u32 %v1712, 4294901760
        %v1885 = vsub.f32 %v1712, %v1884
        %1886 = vmatpush1.msra.mxu0 %v1885
        %1887 = vmatprep.subr.mxu0 0.0
        %v1888 = vand.u32 %v1713, 4294901760
        %v1889 = vsub.f32 %v1713, %v1888
        %1890 = vmatpush1.msra.mxu0 %v1889
        %1891 = vmatprep.subr.mxu0 0.0
        %1892 = vmatpush1.msra.mxu0 0.0
        %1893 = vmatprep.subr.mxu0 0.0
        %1894 = vmatpush1.msra.mxu0 0.0
        %1895 = vmatprep.subr.mxu0 0.0
        %1896 = vmatpush1.msra.mxu0 0.0
        %1897 = vmatprep.subr.mxu0 0.0
        %1898 = vmatpush1.msra.mxu0 0.0
        %1899 = vmatprep.subr.mxu0 0.0
        %1900 = vmatpush1.msra.mxu0 0.0
        %1901 = vmatprep.subr.mxu0 0.0
        %1902 = vmatpush1.msra.mxu0 0.0
        %1903 = vmatprep.subr.mxu0 0.0
        %1904 = vmatpush1.msra.mxu0 0.0
        %1905 = vmatprep.subr.mxu0 0.0
        %1906 = vmatpush1.msra.mxu0 0.0
        %1907 = vmatprep.subr.mxu0 0.0
        %1908 = vmatpush1.msra.mxu0 0.0
        %1909 = vmatprep.subr.mxu0 0.0
        %1910 = vmatpush1.msra.mxu0 0.0
        %1911 = vmatprep.subr.mxu0 0.0
        %1912 = vmatpush1.msra.mxu0 0.0
        %1913 = vmatprep.subr.mxu0 0.0
        %1914 = vmatpush1.msra.mxu0 0.0
        %1915 = vmatprep.subr.mxu0 0.0
        %1916 = vmatpush1.msra.mxu0 0.0
        %1917 = vmatprep.subr.mxu0 0.0
        %1918 = vmatpush1.msra.mxu0 0.0
        %1919 = vmatprep.subr.mxu0 0.0
        %1920 = vmatpush1.msra.mxu0 0.0
        %1921 = vmatprep.subr.mxu0 0.0
        %1922 = vmatpush1.msra.mxu0 0.0
        %1923 = vmatprep.subr.mxu0 0.0
        %1924 = vmatpush1.msra.mxu0 0.0
        %1925 = vmatprep.subr.mxu0 0.0
        %1926 = vmatpush1.msra.mxu0 0.0
        %1927 = vmatprep.subr.mxu0 0.0
        %1928 = vmatpush1.msra.mxu0 0.0
        %1929 = vmatprep.subr.mxu0 0.0
        %1930 = vmatpush1.msra.mxu0 0.0
        %1931 = vmatprep.subr.mxu0 0.0
        %1932 = vmatpush1.msra.mxu0 0.0
        %1933 = vmatprep.subr.mxu0 0.0
        %1934 = vmatpush1.msra.mxu0 0.0
        %1935 = vmatprep.subr.mxu0 0.0
        %1936 = vmatpush1.msra.mxu0 0.0
        %1937 = vmatprep.subr.mxu0 0.0
        %1938 = vmatpush1.msra.mxu0 0.0
        %1939 = vmatprep.subr.mxu0 0.0
        %1940 = vmatpush1.msra.mxu0 0.0
        %1941 = vmatprep.subr.mxu0 0.0
        %1942 = vmatpush1.msra.mxu0 0.0
        %1943 = vmatprep.subr.mxu0 0.0
        %1944 = vmatpush1.msra.mxu0 0.0
        %1945 = vmatprep.subr.mxu0 0.0
        %1946 = vmatpush1.msra.mxu0 0.0
        %1947 = vmatprep.subr.mxu0 0.0
        %1948 = vmatpush1.msra.mxu0 0.0
        %1949 = vmatprep.subr.mxu0 0.0
        %1950 = vmatpush1.msra.mxu0 0.0
        %1951 = vmatprep.mubr.f32.mxu0 0.0
        %v1952 = vand.u32 %v1723, 4294901760
        %v1953 = vsub.f32 %v1723, %v1952
        %1954 = vmatmul.mubr.f32.gmra.mrb[0].mxu0 %v1953
        %v1955 = vpop.f32.mrb[0].mxu0
        %v1956 = vadd.f32 %v1880, %v1955
        %v1957 = vpop.f32.mrb[0].mxu0
        %1958 = vdwg.mxu0
        %1959 = vmatprep.subr.mxu0 0.0
        %v1960 = vand.u32 %v1712, 4294901760
        %1961 = vmatpush1.msra.mxu0 %v1960
        %1962 = vmatprep.subr.mxu0 0.0
        %v1963 = vand.u32 %v1713, 4294901760
        %1964 = vmatpush1.msra.mxu0 %v1963
        %1965 = vmatprep.subr.mxu0 0.0
        %1966 = vmatpush1.msra.mxu0 0.0
        %1967 = vmatprep.subr.mxu0 0.0
        %1968 = vmatpush1.msra.mxu0 0.0
        %1969 = vmatprep.subr.mxu0 0.0
        %1970 = vmatpush1.msra.mxu0 0.0
        %1971 = vmatprep.subr.mxu0 0.0
        %1972 = vmatpush1.msra.mxu0 0.0
        %1973 = vmatprep.subr.mxu0 0.0
        %1974 = vmatpush1.msra.mxu0 0.0
        %1975 = vmatprep.subr.mxu0 0.0
        %1976 = vmatpush1.msra.mxu0 0.0
        %1977 = vmatprep.subr.mxu0 0.0
        %1978 = vmatpush1.msra.mxu0 0.0
        %1979 = vmatprep.subr.mxu0 0.0
        %1980 = vmatpush1.msra.mxu0 0.0
        %1981 = vmatprep.subr.mxu0 0.0
        %1982 = vmatpush1.msra.mxu0 0.0
        %1983 = vmatprep.subr.mxu0 0.0
        %1984 = vmatpush1.msra.mxu0 0.0
        %1985 = vmatprep.subr.mxu0 0.0
        %1986 = vmatpush1.msra.mxu0 0.0
        %1987 = vmatprep.subr.mxu0 0.0
        %1988 = vmatpush1.msra.mxu0 0.0
        %1989 = vmatprep.subr.mxu0 0.0
        %1990 = vmatpush1.msra.mxu0 0.0
        %1991 = vmatprep.subr.mxu0 0.0
        %1992 = vmatpush1.msra.mxu0 0.0
        %1993 = vmatprep.subr.mxu0 0.0
        %1994 = vmatpush1.msra.mxu0 0.0
        %1995 = vmatprep.subr.mxu0 0.0
        %1996 = vmatpush1.msra.mxu0 0.0
        %1997 = vmatprep.subr.mxu0 0.0
        %1998 = vmatpush1.msra.mxu0 0.0
        %1999 = vmatprep.subr.mxu0 0.0
        %2000 = vmatpush1.msra.mxu0 0.0
        %2001 = vmatprep.subr.mxu0 0.0
        %2002 = vmatpush1.msra.mxu0 0.0
        %2003 = vmatprep.subr.mxu0 0.0
        %2004 = vmatpush1.msra.mxu0 0.0
        %2005 = vmatprep.subr.mxu0 0.0
        %2006 = vmatpush1.msra.mxu0 0.0
        %2007 = vmatprep.subr.mxu0 0.0
        %2008 = vmatpush1.msra.mxu0 0.0
        %2009 = vmatprep.subr.mxu0 0.0
        %2010 = vmatpush1.msra.mxu0 0.0
        %2011 = vmatprep.subr.mxu0 0.0
        %2012 = vmatpush1.msra.mxu0 0.0
        %2013 = vmatprep.subr.mxu0 0.0
        %2014 = vmatpush1.msra.mxu0 0.0
        %2015 = vmatprep.subr.mxu0 0.0
        %2016 = vmatpush1.msra.mxu0 0.0
        %2017 = vmatprep.subr.mxu0 0.0
        %2018 = vmatpush1.msra.mxu0 0.0
        %2019 = vmatprep.subr.mxu0 0.0
        %2020 = vmatpush1.msra.mxu0 0.0
        %2021 = vmatprep.subr.mxu0 0.0
        %2022 = vmatpush1.msra.mxu0 0.0
        %2023 = vmatprep.subr.mxu0 0.0
        %2024 = vmatpush1.msra.mxu0 0.0
        %2025 = vmatprep.mubr.f32.mxu0 0.0
        %v2026 = vand.u32 %v1723, 4294901760
        %v2027 = vsub.f32 %v1723, %v2026
        %v2028 = vand.u32 %v2027, 4294901760
        %2029 = vmatmul.mubr.f32.gmra.mrb[0].mxu0 %v2028
        %v2030 = vpop.f32.mrb[0].mxu0
        %v2031 = vadd.f32 %v1956, %v2030
        %v2032 = vpop.f32.mrb[0].mxu0
        %2033 = vdwg.mxu0
        %2034 = vmatprep.subr.mxu0 0.0
        %v2035 = vand.u32 %v1712, 4294901760
        %v2036 = vsub.f32 %v1712, %v2035
        %v2037 = vand.u32 %v2036, 4294901760
        %2038 = vmatpush1.msra.mxu0 %v2037
        %2039 = vmatprep.subr.mxu0 0.0
        %v2040 = vand.u32 %v1713, 4294901760
        %v2041 = vsub.f32 %v1713, %v2040
        %v2042 = vand.u32 %v2041, 4294901760
        %2043 = vmatpush1.msra.mxu0 %v2042
        %2044 = vmatprep.subr.mxu0 0.0
        %2045 = vmatpush1.msra.mxu0 0.0
        %2046 = vmatprep.subr.mxu0 0.0
        %2047 = vmatpush1.msra.mxu0 0.0
        %2048 = vmatprep.subr.mxu0 0.0
        %2049 = vmatpush1.msra.mxu0 0.0
        %2050 = vmatprep.subr.mxu0 0.0
        %2051 = vmatpush1.msra.mxu0 0.0
        %2052 = vmatprep.subr.mxu0 0.0
        %2053 = vmatpush1.msra.mxu0 0.0
        %2054 = vmatprep.subr.mxu0 0.0
        %2055 = vmatpush1.msra.mxu0 0.0
        %2056 = vmatprep.subr.mxu0 0.0
        %2057 = vmatpush1.msra.mxu0 0.0
        %2058 = vmatprep.subr.mxu0 0.0
        %2059 = vmatpush1.msra.mxu0 0.0
        %2060 = vmatprep.subr.mxu0 0.0
        %2061 = vmatpush1.msra.mxu0 0.0
        %2062 = vmatprep.subr.mxu0 0.0
        %2063 = vmatpush1.msra.mxu0 0.0
        %2064 = vmatprep.subr.mxu0 0.0
        %2065 = vmatpush1.msra.mxu0 0.0
        %2066 = vmatprep.subr.mxu0 0.0
        %2067 = vmatpush1.msra.mxu0 0.0
        %2068 = vmatprep.subr.mxu0 0.0
        %2069 = vmatpush1.msra.mxu0 0.0
        %2070 = vmatprep.subr.mxu0 0.0
        %2071 = vmatpush1.msra.mxu0 0.0
        %2072 = vmatprep.subr.mxu0 0.0
        %2073 = vmatpush1.msra.mxu0 0.0
        %2074 = vmatprep.subr.mxu0 0.0
        %2075 = vmatpush1.msra.mxu0 0.0
        %2076 = vmatprep.subr.mxu0 0.0
        %2077 = vmatpush1.msra.mxu0 0.0
        %2078 = vmatprep.subr.mxu0 0.0
        %2079 = vmatpush1.msra.mxu0 0.0
        %2080 = vmatprep.subr.mxu0 0.0
        %2081 = vmatpush1.msra.mxu0 0.0
        %2082 = vmatprep.subr.mxu0 0.0
        %2083 = vmatpush1.msra.mxu0 0.0
        %2084 = vmatprep.subr.mxu0 0.0
        %2085 = vmatpush1.msra.mxu0 0.0
        %2086 = vmatprep.subr.mxu0 0.0
        %2087 = vmatpush1.msra.mxu0 0.0
        %2088 = vmatprep.subr.mxu0 0.0
        %2089 = vmatpush1.msra.mxu0 0.0
        %2090 = vmatprep.subr.mxu0 0.0
        %2091 = vmatpush1.msra.mxu0 0.0
        %2092 = vmatprep.subr.mxu0 0.0
        %2093 = vmatpush1.msra.mxu0 0.0
        %2094 = vmatprep.subr.mxu0 0.0
        %2095 = vmatpush1.msra.mxu0 0.0
        %2096 = vmatprep.subr.mxu0 0.0
        %2097 = vmatpush1.msra.mxu0 0.0
        %2098 = vmatprep.subr.mxu0 0.0
        %2099 = vmatpush1.msra.mxu0 0.0
        %2100 = vmatprep.subr.mxu0 0.0
        %2101 = vmatpush1.msra.mxu0 0.0
        %2102 = vmatprep.subr.mxu0 0.0
        %2103 = vmatpush1.msra.mxu0 0.0
        %2104 = vmatprep.mubr.f32.mxu0 0.0
        %v2105 = vand.u32 %v1723, 4294901760
        %2106 = vmatmul.mubr.f32.gmra.mrb[0].mxu0 %v2105
        %v2107 = vpop.f32.mrb[0].mxu0
        %v2108 = vadd.f32 %v2031, %v2107
        %v2109 = vpop.f32.mrb[0].mxu0
        %2110 = vdwg.mxu0
        %2111 = vmatprep.subr.mxu0 0.0
        %v2112 = vand.u32 %v1712, 4294901760
        %2113 = vmatpush1.msra.mxu0 %v2112
        %2114 = vmatprep.subr.mxu0 0.0
        %v2115 = vand.u32 %v1713, 4294901760
        %2116 = vmatpush1.msra.mxu0 %v2115
        %2117 = vmatprep.subr.mxu0 0.0
        %2118 = vmatpush1.msra.mxu0 0.0
        %2119 = vmatprep.subr.mxu0 0.0
        %2120 = vmatpush1.msra.mxu0 0.0
        %2121 = vmatprep.subr.mxu0 0.0
        %2122 = vmatpush1.msra.mxu0 0.0
        %2123 = vmatprep.subr.mxu0 0.0
        %2124 = vmatpush1.msra.mxu0 0.0
        %2125 = vmatprep.subr.mxu0 0.0
        %2126 = vmatpush1.msra.mxu0 0.0
        %2127 = vmatprep.subr.mxu0 0.0
        %2128 = vmatpush1.msra.mxu0 0.0
        %2129 = vmatprep.subr.mxu0 0.0
        %2130 = vmatpush1.msra.mxu0 0.0
        %2131 = vmatprep.subr.mxu0 0.0
        %2132 = vmatpush1.msra.mxu0 0.0
        %2133 = vmatprep.subr.mxu0 0.0
        %2134 = vmatpush1.msra.mxu0 0.0
        %2135 = vmatprep.subr.mxu0 0.0
        %2136 = vmatpush1.msra.mxu0 0.0
        %2137 = vmatprep.subr.mxu0 0.0
        %2138 = vmatpush1.msra.mxu0 0.0
        %2139 = vmatprep.subr.mxu0 0.0
        %2140 = vmatpush1.msra.mxu0 0.0
        %2141 = vmatprep.subr.mxu0 0.0
        %2142 = vmatpush1.msra.mxu0 0.0
        %2143 = vmatprep.subr.mxu0 0.0
        %2144 = vmatpush1.msra.mxu0 0.0
        %2145 = vmatprep.subr.mxu0 0.0
        %2146 = vmatpush1.msra.mxu0 0.0
        %2147 = vmatprep.subr.mxu0 0.0
        %2148 = vmatpush1.msra.mxu0 0.0
        %2149 = vmatprep.subr.mxu0 0.0
        %2150 = vmatpush1.msra.mxu0 0.0
        %2151 = vmatprep.subr.mxu0 0.0
        %2152 = vmatpush1.msra.mxu0 0.0
        %2153 = vmatprep.subr.mxu0 0.0
        %2154 = vmatpush1.msra.mxu0 0.0
        %2155 = vmatprep.subr.mxu0 0.0
        %2156 = vmatpush1.msra.mxu0 0.0
        %2157 = vmatprep.subr.mxu0 0.0
        %2158 = vmatpush1.msra.mxu0 0.0
        %2159 = vmatprep.subr.mxu0 0.0
        %2160 = vmatpush1.msra.mxu0 0.0
        %2161 = vmatprep.subr.mxu0 0.0
        %2162 = vmatpush1.msra.mxu0 0.0
        %2163 = vmatprep.subr.mxu0 0.0
        %2164 = vmatpush1.msra.mxu0 0.0
        %2165 = vmatprep.subr.mxu0 0.0
        %2166 = vmatpush1.msra.mxu0 0.0
        %2167 = vmatprep.subr.mxu0 0.0
        %2168 = vmatpush1.msra.mxu0 0.0
        %2169 = vmatprep.subr.mxu0 0.0
        %2170 = vmatpush1.msra.mxu0 0.0
        %2171 = vmatprep.subr.mxu0 0.0
        %2172 = vmatpush1.msra.mxu0 0.0
        %2173 = vmatprep.subr.mxu0 0.0
        %2174 = vmatpush1.msra.mxu0 0.0
        %2175 = vmatprep.subr.mxu0 0.0
        %2176 = vmatpush1.msra.mxu0 0.0
        %2177 = vmatprep.mubr.f32.mxu0 0.0
        %v2178 = vand.u32 %v1723, 4294901760
        %2179 = vmatmul.mubr.f32.gmra.mrb[0].mxu0 %v2178
        %v2180 = vpop.f32.mrb[0].mxu0
        %v2181 = vadd.f32 %v2108, %v2180
        %v2182 = vpop.f32.mrb[0].mxu0
        %2183 = vdwg.mxu0
        %2184 = vst [vmem:[%s269] sm:$0x3] %v2181
        %s2185 = sand.u32 %s181, 1
        %s2186 = scalar_lea.sflag [#allocation3], %s2185
        %s2187 = sand.u32 %s181, 1
        %s2188 = smul.addr %s2187, 2
        %s2189 = scalar_lea.vmem [#allocation2], %s2188
        // Predicated region
        $region49: #{tpu_custom_call.1} parent=47 // pred_check
          %p2190 = pneg %p191
        $region50: #{tpu_custom_call.1} parent=47 // pred_check_branch
          %2192 = sbr.rel (%p2190) target = $region52
        $region51: #{tpu_custom_call.1} parent=47 // pred_region
          %s2194 = ssub.s32 32, 32
          %2195 = vsyncadd %s2186, %s2194
          %s2196 = smul.addr %s21, 32
          %s2197 = scalar_lea.hbm %s7, %s2196
          %s2199 = sshll.u32 %s2189, 4
          %s2200 = int_to_ptr.vmem [resolvable:$true] %s2199
          %2202 = dma.vmem_to_hbm [thread:$0]  %s2200, 32, %s2197, %s2186
        $region52: #{tpu_custom_call.1} parent=47 // pred_fallthru
          _
      $region48: #{tpu_custom_call.1} parent=5 // pred_fallthru
        _
      %p2203 = scmp.le.s32.totalorder 2, %s16
      // Predicated region
      $region53: #{tpu_custom_call.1} parent=5 // pred_check
        %p2204 = pneg %p2203
      $region54: #{tpu_custom_call.1} parent=5 // pred_check_branch
        %2206 = sbr.rel (%p2204) target = $region56
      $region55: #{tpu_custom_call.1} parent=5 // pred_region
        %s2207 = ssub.s32 %s16, 2
        // Predicated region
        $region57: #{tpu_custom_call.1} parent=55 // pred_check
          %p2208 = pneg %p197
        $region58: #{tpu_custom_call.1} parent=55 // pred_check_branch
          %2210 = sbr.rel (%p2208) target = $region60
        $region59: #{tpu_custom_call.1} parent=55 // pred_region
          %s2211 = sand.u32 %s182, 1
          %s2212 = scalar_lea.sflag [#allocation3], %s2211
          %s2213 = sand.u32 %s182, 1
          %s2214 = smul.addr %s2213, 2
          %s2215 = scalar_lea.vmem [#allocation2], %s2214
          %2216 = dma.done %s2212, 32
        $region60: #{tpu_custom_call.1} parent=55 // pred_fallthru
          _
      $region56: #{tpu_custom_call.1} parent=5 // pred_fallthru
        _
    $region6: #{tpu_custom_call.1} parent=1 // loop_footer
      %s20 = sadd.s32 1, %s16
    $region7: #{tpu_custom_call.1} parent=1 // loop_footer_branch
      %15 = sbr.rel target = $region3
    $region8: #{tpu_custom_call.1} parent=1 // loop_exit
      _
    %2217 = vsyncpa [#allocation3], 1
    %s2218 = scalar_lea.sflag [#allocation3], 1
    %2219 = vsyncpa %s2218, 1

</llo_original>
